<compile_context>
chip_gen: v7x
topology: tpu7x:2x2x1
jax: 0.10.0
libtpu: 0.0.40
codegen_flags: <defaults>
</compile_context>

<pallas_src>
import jax
import jax.numpy as jnp
from jax import lax
from jax.experimental import pallas as pl
from jax.experimental.pallas import tpu as pltpu

EPS = 1e-6
HALO = 2  # two stacked k=3 convs need +/-2 input columns per L tile


def _ln_swish(h, g, b):
    # LayerNorm over the channel axis (axis 0), eps=1e-6, affine; then swish.
    # Single-pass stats: E[h^2] - mu^2 (f32, clamped at 0 for safety).
    inv_c = 1.0 / h.shape[0]
    mu = jnp.sum(h, axis=0, keepdims=True) * inv_c
    ex2 = jnp.sum(h * h, axis=0, keepdims=True) * inv_c
    var = jnp.maximum(ex2 - mu * mu, 0.0)
    hn = (h - mu) * lax.rsqrt(var + EPS) * g + b
    return hn * jax.nn.sigmoid(hn)


def _conv3(w_ref, b_ref, taps, fused):
    # taps: 3 bf16 arrays (C, n) holding the k=0,1,2 shifted inputs.
    if fused:
        # (Cout, 3C) @ (3C, n): best MXU K-packing for small C (v5e 128-wide MXU).
        t = jnp.concatenate(taps, axis=0)
        return jnp.dot(w_ref[...], t,
                       preferred_element_type=jnp.float32) + b_ref[...]
    # C >= 128: three accumulating K=C matmuls, no (3C, n) taps temp.
    acc = jnp.dot(w_ref[0], taps[0], preferred_element_type=jnp.float32)
    acc = acc + jnp.dot(w_ref[1], taps[1], preferred_element_type=jnp.float32)
    acc = acc + jnp.dot(w_ref[2], taps[2], preferred_element_type=jnp.float32)
    return acc + b_ref[...]


def _make_kernel(has_shortcut, fused1, fused2, tl, l_true, padded):
    def kernel(x_ref, hal_ref, g1_ref, b1_ref, w1_ref, cb1_ref,
               g2_ref, b2_ref, w2_ref, cb2_ref, *rest):
        if has_shortcut:
            ws_ref, bs_ref, out_ref = rest
        else:
            (out_ref,) = rest

        l0 = pl.program_id(1) * tl

        x = x_ref[0]                              # (Cin, TL), input dtype
        xf = x.astype(jnp.float32)
        g1 = g1_ref[...]
        b1 = b1_ref[...]
        g2 = g2_ref[...]
        b2 = b2_ref[...]

        # norm1 + swish on the center tile (always in-range unless L was padded).
        h1c = _ln_swish(xf, g1, b1)
        if padded:
            posc = l0 + lax.broadcasted_iota(jnp.int32, (1, tl), 1)
            h1c = jnp.where(posc < l_true, h1c, 0.0)
        h1c = h1c.astype(jnp.bfloat16)

        # norm1 + swish on the 4 halo columns; zero out-of-range columns with
        # scalar/row multiplies (reproduces Conv1d's zero padding of its
        # *post-swish* input; LayerNorm is per-position so clamped halo data
        # never leaks into kept outputs).
        hh = _ln_swish(hal_ref[0, 0].astype(jnp.float32), g1, b1)  # (Cin, 4)
        valid_l = (l0 > 0).astype(jnp.float32)
        valid_r = ((l0 + tl + lax.broadcasted_iota(jnp.int32, (1, HALO), 1))
                   < l_true).astype(jnp.float32)
        h1l = (hh[:, 0:HALO] * valid_l).astype(jnp.bfloat16)
        h1r = (hh[:, HALO:2 * HALO] * valid_r).astype(jnp.bfloat16)

        # conv1 over positions l0-1 .. l0+tl (width TL+2).
        taps1 = (jnp.concatenate([h1l, h1c], axis=1),                        # p-1
                 jnp.concatenate([h1l[:, 1:HALO], h1c, h1r[:, 0:1]], axis=1),  # p
                 jnp.concatenate([h1c, h1r], axis=1))                        # p+1
        y1 = _conv3(w1_ref, cb1_ref, taps1, fused1)          # (Cout, TL+2) f32

        # norm2 + swish; zero columns outside [0, L) (conv2's zero padding).
        h2 = _ln_swish(y1, g2, b2)
        pos2 = l0 - 1 + lax.broadcasted_iota(jnp.int32, (1, tl + 2), 1)
        h2 = jnp.where((pos2 >= 0) & (pos2 < l_true), h2, 0.0)
        h2 = h2.astype(jnp.bfloat16)

        # conv2 over positions l0 .. l0+TL-1.
        taps2 = (h2[:, 0:tl], h2[:, 1:tl + 1], h2[:, 2:tl + 2])
        y2 = _conv3(w2_ref, cb2_ref, taps2, fused2)          # (Cout, TL) f32

        if has_shortcut:                                     # 1x1 nin_shortcut
            xs = jnp.dot(ws_ref[...], x.astype(jnp.bfloat16),
                         preferred_element_type=jnp.float32) + bs_ref[...]
        else:
            xs = xf
        out_ref[0] = (xs + y2).astype(out_ref.dtype)

    return kernel


def _choose_tile(L, B, cin, cout, itemsize, has_shortcut, vmem_budget, max_tl):
    """Pick (TL, padded L, n_tiles). TL is a multiple of 128 (or the full L)."""
    # Constant operands (weights/biases), double-buffered by the pipeline.
    const_b = 4 * (3 * cin * cout + 3 * cout * cout
                   + (cin * cout if has_shortcut else 0))
    const_b += 8 * 4 * 6 * max(cin, cout)
    # Per-L-column VMEM: double-buffered in/out tiles + f32/bf16 temporaries.
    per_col = (2 * (cin + cout) * itemsize
               + 4 * (3 * cin + 8 * cout)
               + 2 * (4 * cin + 5 * cout))
    avail = vmem_budget - const_b - (4 << 20)       # headroom for Mosaic scratch
    cap = 4096
    if avail > per_col * 128:
        cap = max(128, min(cap, int(avail // per_col)))
    else:
        cap = 128
    if max_tl is not None:
        cap = min(cap, max(128, int(max_tl)))
    cap = max(128, (cap // 128) * 128)

    if L <= 128:
        return L, L, 1

    m = -(-L // 128)                                # 128-column chunks
    k_cap = max(1, cap // 128)
    k = next((kk for kk in range(min(k_cap, m), 0, -1) if m % kk == 0),
             min(k_cap, m))
    n_lt = -(-m // k)
    if B * n_lt < 2 and m >= 2:
        # Give the second TensorCore (v7x) something to do; near-free on 1-TC chips.
        k = next((kk for kk in range(m // 2, 0, -1) if m % kk == 0), k)
        n_lt = -(-m // k)
    tl = 128 * k
    return tl, n_lt * tl, n_lt


def resnet_block_1d(x, params, *, max_tl=None):
    """Pallas forward of ResnetBlock1D.  x: (B, Cin, L) -> (B, Cout, L)."""
    B, Cin, L = x.shape
    Cout = params["conv1_w"].shape[0]
    has_shortcut = Cin != Cout
    fused1 = Cin < 128     # conv1 K = 3*Cin
    fused2 = Cout < 128    # conv2 K = 3*Cout

    # Generation-aware VMEM budget (v7x: 64 MiB, v5e/v6e: 128 MiB per core).
    try:
        vmem_cap = int(pltpu.get_tpu_info().vmem_capacity_bytes)
    except Exception:
        vmem_cap = 64 * 2**20
    vmem_budget = (vmem_cap * 3) // 4

    tl, Lp, n_lt = _choose_tile(L, B, Cin, Cout, x.dtype.itemsize,
                                has_shortcut, vmem_budget, max_tl)

    x_in = x if Lp == L else jnp.pad(x, ((0, 0), (0, 0), (0, Lp - L)))

    # Per-tile halo columns (positions t*TL-2, t*TL-1, t*TL+TL, t*TL+TL+1),
    # gathered once outside the kernel (tiny: B * n_lt * Cin * 4 elements) and
    # auto-pipelined -> prefetched one grid step ahead, no in-kernel DMA.
    idx = (jnp.arange(n_lt) * tl)[:, None] + jnp.array([-HALO, -1, tl, tl + 1])[None, :]
    idx = jnp.clip(idx, 0, Lp - 1)
    halos = jnp.take(x_in, idx.reshape(-1), axis=2).reshape(B, Cin, n_lt, 2 * HALO)
    halos = jnp.transpose(halos, (0, 2, 1, 3))            # (B, n_lt, Cin, 4)

    def pack_w(w, fused):
        # PyTorch (Cout, Cin, 3) -> fused (Cout, 3*Cin) or split (3, Cout, Cin), bf16.
        co, ci, k = w.shape
        if fused:
            return jnp.transpose(w, (0, 2, 1)).reshape(co, k * ci).astype(jnp.bfloat16)
        return jnp.transpose(w, (2, 0, 1)).astype(jnp.bfloat16)

    col = lambda v: v.reshape(-1, 1).astype(jnp.float32)
    w1 = pack_w(params["conv1_w"], fused1)
    w2 = pack_w(params["conv2_w"], fused2)

    def const(shape):
        return pl.BlockSpec(shape, lambda b, t, _n=len(shape): (0,) * _n)

    in_specs = [
        pl.BlockSpec((1, Cin, tl), lambda b, t: (b, 0, t)),           # x tile
        pl.BlockSpec((1, 1, Cin, 2 * HALO), lambda b, t: (b, t, 0, 0)),  # halos
        const((Cin, 1)), const((Cin, 1)),                             # norm1 g/b
        const(w1.shape), const((Cout, 1)),                            # conv1 w/b
        const((Cout, 1)), const((Cout, 1)),                           # norm2 g/b
        const(w2.shape), const((Cout, 1)),                            # conv2 w/b
    ]
    args = [
        x_in, halos,
        col(params["norm1_g"]), col(params["norm1_b"]), w1, col(params["conv1_b"]),
        col(params["norm2_g"]), col(params["norm2_b"]), w2, col(params["conv2_b"]),
    ]
    if has_shortcut:
        ws = params["shortcut_w"]
        ws = ws.reshape(Cout, Cin) if ws.ndim == 3 else ws
        in_specs += [const((Cout, Cin)), const((Cout, 1))]
        args += [ws.astype(jnp.bfloat16), col(params["shortcut_b"])]

    out = pl.pallas_call(
        _make_kernel(has_shortcut, fused1, fused2, tl, L, Lp != L),
        out_shape=jax.ShapeDtypeStruct((B, Cout, Lp), x.dtype),
        grid=(B, n_lt),
        in_specs=in_specs,
        out_specs=pl.BlockSpec((1, Cout, tl), lambda b, t: (b, 0, t)),
        compiler_params=pltpu.CompilerParams(
            dimension_semantics=("parallel", "parallel"),
            vmem_limit_bytes=int(min(vmem_budget, vmem_cap))),
    )(*args)
    # TODO(synk): optionally emit bf16 output to halve HBM writeback when the
    # consumer tolerates it.
    return out if Lp == L else out[:, :, :L]


def ref_forward(x, params):
    """Pure-JAX f32 reference of the module's math (PyTorch layouts)."""
    x = x.astype(jnp.float32)
    B, Cin, L = x.shape

    def ln(h, g, b):                       # LayerNorm over channels (axis 1)
        mu = jnp.mean(h, axis=1, keepdims=True)
        var = jnp.mean((h - mu) ** 2, axis=1, keepdims=True)
        return (h - mu) * lax.rsqrt(var + EPS) * g[None, :, None] + b[None, :, None]

    def conv3(h, w, b):                    # Conv1d k=3, stride 1, padding 1
        hp = jnp.pad(h, ((0, 0), (0, 0), (1, 1)))
        out = sum(jnp.einsum("oi,bil->bol", w[:, :, k], hp[:, :, k:k + L])
                  for k in range(3))
        return out + b[None, :, None]

    h = ln(x, params["norm1_g"], params["norm1_b"])
    h = h * jax.nn.sigmoid(h)
    h = conv3(h, params["conv1_w"], params["conv1_b"])
    h = ln(h, params["norm2_g"], params["norm2_b"])
    h = h * jax.nn.sigmoid(h)
    h = conv3(h, params["conv2_w"], params["conv2_b"])
    if "shortcut_w" in params:
        xs = (jnp.einsum("oi,bil->bol", params["shortcut_w"], x)
              + params["shortcut_b"][None, :, None])
    else:
        xs = x
    return xs + h


def init_params(key, in_channels, out_channels):
    """Synthetic parameters in PyTorch-like shapes."""
    ks = jax.random.split(key, 8)
    s1 = 1.0 / (3 * in_channels) ** 0.5
    s2 = 1.0 / (3 * out_channels) ** 0.5
    params = {
        "norm1_g": 1.0 + 0.05 * jax.random.normal(ks[0], (in_channels,), jnp.float32),
        "norm1_b": 0.05 * jax.random.normal(ks[1], (in_channels,), jnp.float32),
        "conv1_w": s1 * jax.random.normal(ks[2], (out_channels, in_channels, 3), jnp.float32),
        "conv1_b": s1 * jax.random.normal(ks[3], (out_channels,), jnp.float32),
        "norm2_g": 1.0 + 0.05 * jax.random.normal(ks[4], (out_channels,), jnp.float32),
        "norm2_b": 0.05 * jax.random.normal(ks[5], (out_channels,), jnp.float32),
        "conv2_w": s2 * jax.random.normal(ks[6], (out_channels, out_channels, 3), jnp.float32),
        "conv2_b": s2 * jax.random.normal(ks[7], (out_channels,), jnp.float32),
    }
    if in_channels != out_channels:
        kk = jax.random.split(ks[0], 2)
        ss = 1.0 / in_channels ** 0.5
        params["shortcut_w"] = ss * jax.random.normal(
            kk[0], (out_channels, in_channels), jnp.float32)
        params["shortcut_b"] = ss * jax.random.normal(
            kk[1], (out_channels,), jnp.float32)
    return params


if __name__ == "__main__":
    key = jax.random.PRNGKey(0)

    # (B, Cin, Cout, L, max_tl):
    #   shortcut + single tile, identity path, multi-tile halo path,
    #   split-conv (C >= 128) + forced 2 tiles, ragged L (padded) + shortcut.
    configs = [
        (2, 32, 64, 16, None),
        (2, 32, 32, 16, None),
        (2, 32, 32, 512, 128),
        (1, 128, 128, 256, None),
        (2, 32, 48, 200, 128),
    ]
    for i, (B, Cin, Cout, L, max_tl) in enumerate(configs):
        kx, kp = jax.random.split(jax.random.fold_in(key, i))
        x = jax.random.normal(kx, (B, Cin, L), jnp.float32)   # PyTorch NCL layout
        params = init_params(kp, Cin, Cout)

        out = jax.block_until_ready(resnet_block_1d(x, params, max_tl=max_tl))
        ref = jax.block_until_ready(ref_forward(x, params))

        assert out.shape == (B, Cout, L), (out.shape, (B, Cout, L))
        # bf16 matmul inputs (f32 accumulation) vs. the pure-f32 reference.
        tol = 5e-2 * max(1.0, float(jnp.max(jnp.abs(ref))))
        err = float(jnp.max(jnp.abs(out - ref)))
        assert err < tol, f"config {i}: max abs err {err} (tol {tol})"

    print("KERNEL_OK")
</pallas_src>

<mosaic_0001>
module attributes {stable_mosaic.version = 11 : i64} {
  func.func @kernel(%arg0: i32, %arg1: i32, %arg2: memref<1x32x16xf32, #tpu.memory_space<vmem>>, %arg3: memref<1x1x32x4xf32, #tpu.memory_space<vmem>>, %arg4: memref<32x1xf32, #tpu.memory_space<vmem>>, %arg5: memref<32x1xf32, #tpu.memory_space<vmem>>, %arg6: memref<64x96xbf16, #tpu.memory_space<vmem>>, %arg7: memref<64x1xf32, #tpu.memory_space<vmem>>, %arg8: memref<64x1xf32, #tpu.memory_space<vmem>>, %arg9: memref<64x1xf32, #tpu.memory_space<vmem>>, %arg10: memref<64x192xbf16, #tpu.memory_space<vmem>>, %arg11: memref<64x1xf32, #tpu.memory_space<vmem>>, %arg12: memref<64x32xbf16, #tpu.memory_space<vmem>>, %arg13: memref<64x1xf32, #tpu.memory_space<vmem>>, %arg14: memref<1x64x16xf32, #tpu.memory_space<vmem>>) attributes {dimension_semantics = [#tpu.dimension_semantics<parallel>, #tpu.dimension_semantics<parallel>], iteration_bounds = array<i64: 2, 1>, scalar_prefetch = 0 : i64, scratch_operands = 0 : i64, tpu.core_type = #tpu.core_type<tc>, window_params = [{transform_indices = @transform_0, window_bounds = array<i64: 1, 32, 16>}, {transform_indices = @transform_1, window_bounds = array<i64: 1, 1, 32, 4>}, {pipeline_mode = #tpu.pipeline_mode<synchronous>, transform_indices = @transform_2, window_bounds = array<i64: 32, 1>}, {pipeline_mode = #tpu.pipeline_mode<synchronous>, transform_indices = @transform_3, window_bounds = array<i64: 32, 1>}, {pipeline_mode = #tpu.pipeline_mode<synchronous>, transform_indices = @transform_4, window_bounds = array<i64: 64, 96>}, {pipeline_mode = #tpu.pipeline_mode<synchronous>, transform_indices = @transform_5, window_bounds = array<i64: 64, 1>}, {pipeline_mode = #tpu.pipeline_mode<synchronous>, transform_indices = @transform_6, window_bounds = array<i64: 64, 1>}, {pipeline_mode = #tpu.pipeline_mode<synchronous>, transform_indices = @transform_7, window_bounds = array<i64: 64, 1>}, {pipeline_mode = #tpu.pipeline_mode<synchronous>, transform_indices = @transform_8, window_bounds = array<i64: 64, 192>}, {pipeline_mode = #tpu.pipeline_mode<synchronous>, transform_indices = @transform_9, window_bounds = array<i64: 64, 1>}, {pipeline_mode = #tpu.pipeline_mode<synchronous>, transform_indices = @transform_10, window_bounds = array<i64: 64, 32>}, {pipeline_mode = #tpu.pipeline_mode<synchronous>, transform_indices = @transform_11, window_bounds = array<i64: 64, 1>}, {transform_indices = @transform_12, window_bounds = array<i64: 1, 64, 16>}]} {
    %c16_i32 = arith.constant 16 : i32
    %0 = arith.muli %arg1, %c16_i32 : i32
    %c0 = arith.constant 0 : index
    %c0_0 = arith.constant 0 : index
    %c0_1 = arith.constant 0 : index
    %1 = vector.load %arg2[%c0, %c0_0, %c0_1] : memref<1x32x16xf32, #tpu.memory_space<vmem>>, vector<1x32x16xf32>
    %2 = vector.shape_cast %1 : vector<1x32x16xf32> to vector<32x16xf32>
    %c0_2 = arith.constant 0 : index
    %c0_3 = arith.constant 0 : index
    %3 = vector.load %arg4[%c0_2, %c0_3] : memref<32x1xf32, #tpu.memory_space<vmem>>, vector<32x1xf32>
    %c0_4 = arith.constant 0 : index
    %c0_5 = arith.constant 0 : index
    %4 = vector.load %arg5[%c0_4, %c0_5] : memref<32x1xf32, #tpu.memory_space<vmem>>, vector<32x1xf32>
    %c0_6 = arith.constant 0 : index
    %c0_7 = arith.constant 0 : index
    %5 = vector.load %arg8[%c0_6, %c0_7] : memref<64x1xf32, #tpu.memory_space<vmem>>, vector<64x1xf32>
    %c0_8 = arith.constant 0 : index
    %c0_9 = arith.constant 0 : index
    %6 = vector.load %arg9[%c0_8, %c0_9] : memref<64x1xf32, #tpu.memory_space<vmem>>, vector<64x1xf32>
    %cst = arith.constant dense<0.000000e+00> : vector<16xf32>
    %7 = vector.multi_reduction <add>, %2, %cst [0] : vector<32x16xf32> to vector<16xf32>
    %8 = vector.shape_cast %7 : vector<16xf32> to vector<1x16xf32>
    %cst_10 = arith.constant 3.125000e-02 : f32
    %9 = vector.broadcast %cst_10 : f32 to vector<1x16xf32>
    %10 = arith.mulf %8, %9 : vector<1x16xf32>
    %11 = arith.mulf %2, %2 : vector<32x16xf32>
    %cst_11 = arith.constant dense<0.000000e+00> : vector<16xf32>
    %12 = vector.multi_reduction <add>, %11, %cst_11 [0] : vector<32x16xf32> to vector<16xf32>
    %13 = vector.shape_cast %12 : vector<16xf32> to vector<1x16xf32>
    %cst_12 = arith.constant 3.125000e-02 : f32
    %14 = vector.broadcast %cst_12 : f32 to vector<1x16xf32>
    %15 = arith.mulf %13, %14 : vector<1x16xf32>
    %16 = arith.mulf %10, %10 : vector<1x16xf32>
    %17 = arith.subf %15, %16 : vector<1x16xf32>
    %cst_13 = arith.constant 0.000000e+00 : f32
    %18 = vector.broadcast %cst_13 : f32 to vector<1x16xf32>
    %19 = arith.maximumf %17, %18 : vector<1x16xf32>
    %20 = vector.broadcast %10 : vector<1x16xf32> to vector<32x16xf32>
    %21 = arith.subf %2, %20 : vector<32x16xf32>
    %cst_14 = arith.constant 9.99999997E-7 : f32
    %22 = vector.broadcast %cst_14 : f32 to vector<1x16xf32>
    %23 = arith.addf %19, %22 : vector<1x16xf32>
    %24 = math.rsqrt %23 : vector<1x16xf32>
    %25 = vector.broadcast %24 : vector<1x16xf32> to vector<32x16xf32>
    %26 = arith.mulf %21, %25 : vector<32x16xf32>
    %27 = vector.broadcast %3 : vector<32x1xf32> to vector<32x16xf32>
    %28 = arith.mulf %26, %27 : vector<32x16xf32>
    %29 = vector.broadcast %4 : vector<32x1xf32> to vector<32x16xf32>
    %30 = arith.addf %28, %29 : vector<32x16xf32>
    %31 = arith.negf %30 : vector<32x16xf32>
    %32 = math.exp %31 : vector<32x16xf32>
    %cst_15 = arith.constant 1.000000e+00 : f32
    %33 = vector.broadcast %cst_15 : f32 to vector<32x16xf32>
    %34 = arith.addf %33, %32 : vector<32x16xf32>
    %35 = arith.divf %33, %34 : vector<32x16xf32>
    %36 = arith.mulf %30, %35 : vector<32x16xf32>
    %37 = arith.truncf %36 : vector<32x16xf32> to vector<32x16xbf16>
    %c0_16 = arith.constant 0 : index
    %c0_17 = arith.constant 0 : index
    %c0_18 = arith.constant 0 : index
    %c0_19 = arith.constant 0 : index
    %38 = vector.load %arg3[%c0_16, %c0_17, %c0_18, %c0_19] : memref<1x1x32x4xf32, #tpu.memory_space<vmem>>, vector<1x1x32x4xf32>
    %39 = vector.shape_cast %38 : vector<1x1x32x4xf32> to vector<32x4xf32>
    %cst_20 = arith.constant dense<0.000000e+00> : vector<4xf32>
    %40 = vector.multi_reduction <add>, %39, %cst_20 [0] : vector<32x4xf32> to vector<4xf32>
    %41 = vector.shape_cast %40 : vector<4xf32> to vector<1x4xf32>
    %cst_21 = arith.constant 3.125000e-02 : f32
    %42 = vector.broadcast %cst_21 : f32 to vector<1x4xf32>
    %43 = arith.mulf %41, %42 : vector<1x4xf32>
    %44 = arith.mulf %39, %39 : vector<32x4xf32>
    %cst_22 = arith.constant dense<0.000000e+00> : vector<4xf32>
    %45 = vector.multi_reduction <add>, %44, %cst_22 [0] : vector<32x4xf32> to vector<4xf32>
    %46 = vector.shape_cast %45 : vector<4xf32> to vector<1x4xf32>
    %cst_23 = arith.constant 3.125000e-02 : f32
    %47 = vector.broadcast %cst_23 : f32 to vector<1x4xf32>
    %48 = arith.mulf %46, %47 : vector<1x4xf32>
    %49 = arith.mulf %43, %43 : vector<1x4xf32>
    %50 = arith.subf %48, %49 : vector<1x4xf32>
    %cst_24 = arith.constant 0.000000e+00 : f32
    %51 = vector.broadcast %cst_24 : f32 to vector<1x4xf32>
    %52 = arith.maximumf %50, %51 : vector<1x4xf32>
    %53 = vector.broadcast %43 : vector<1x4xf32> to vector<32x4xf32>
    %54 = arith.subf %39, %53 : vector<32x4xf32>
    %cst_25 = arith.constant 9.99999997E-7 : f32
    %55 = vector.broadcast %cst_25 : f32 to vector<1x4xf32>
    %56 = arith.addf %52, %55 : vector<1x4xf32>
    %57 = math.rsqrt %56 : vector<1x4xf32>
    %58 = vector.broadcast %57 : vector<1x4xf32> to vector<32x4xf32>
    %59 = arith.mulf %54, %58 : vector<32x4xf32>
    %60 = vector.broadcast %3 : vector<32x1xf32> to vector<32x4xf32>
    %61 = arith.mulf %59, %60 : vector<32x4xf32>
    %62 = vector.broadcast %4 : vector<32x1xf32> to vector<32x4xf32>
    %63 = arith.addf %61, %62 : vector<32x4xf32>
    %64 = arith.negf %63 : vector<32x4xf32>
    %65 = math.exp %64 : vector<32x4xf32>
    %cst_26 = arith.constant 1.000000e+00 : f32
    %66 = vector.broadcast %cst_26 : f32 to vector<32x4xf32>
    %67 = arith.addf %66, %65 : vector<32x4xf32>
    %68 = arith.divf %66, %67 : vector<32x4xf32>
    %69 = arith.mulf %63, %68 : vector<32x4xf32>
    %c0_i32 = arith.constant 0 : i32
    %70 = arith.cmpi sgt, %0, %c0_i32 : i32
    %71 = arith.extui %70 : i1 to i32
    %72 = arith.sitofp %71 : i32 to f32
    %c16_i32_27 = arith.constant 16 : i32
    %73 = arith.addi %0, %c16_i32_27 : i32
    %74 = tpu.iota {dimensions = array<i32: 1>} : vector<1x2xi32>
    %75 = vector.broadcast %73 : i32 to vector<1x2xi32>
    %76 = arith.addi %75, %74 : vector<1x2xi32>
    %c16_i32_28 = arith.constant 16 : i32
    %77 = vector.broadcast %c16_i32_28 : i32 to vector<1x2xi32>
    %78 = arith.cmpi slt, %76, %77 : vector<1x2xi32>
    %79 = arith.extui %78 : vector<1x2xi1> to vector<1x2xi32>
    %80 = arith.sitofp %79 : vector<1x2xi32> to vector<1x2xf32>
    %81 = vector.extract_strided_slice %69 {offsets = [0, 0], sizes = [32, 2], strides = [1, 1]} : vector<32x4xf32> to vector<32x2xf32>
    %82 = vector.broadcast %72 : f32 to vector<32x2xf32>
    %83 = arith.mulf %81, %82 : vector<32x2xf32>
    %84 = arith.truncf %83 : vector<32x2xf32> to vector<32x2xbf16>
    %85 = vector.extract_strided_slice %69 {offsets = [0, 2], sizes = [32, 2], strides = [1, 1]} : vector<32x4xf32> to vector<32x2xf32>
    %86 = vector.broadcast %80 : vector<1x2xf32> to vector<32x2xf32>
    %87 = arith.mulf %85, %86 : vector<32x2xf32>
    %88 = arith.truncf %87 : vector<32x2xf32> to vector<32x2xbf16>
    %89 = tpu.concatenate %84, %37 in 1 : vector<32x2xbf16>, vector<32x16xbf16> -> vector<32x18xbf16>
    %90 = vector.extract_strided_slice %84 {offsets = [0, 1], sizes = [32, 1], strides = [1, 1]} : vector<32x2xbf16> to vector<32x1xbf16>
    %91 = vector.extract_strided_slice %88 {offsets = [0, 0], sizes = [32, 1], strides = [1, 1]} : vector<32x2xbf16> to vector<32x1xbf16>
    %92 = tpu.concatenate %90, %37, %91 in 1 : vector<32x1xbf16>, vector<32x16xbf16>, vector<32x1xbf16> -> vector<32x18xbf16>
    %93 = tpu.concatenate %37, %88 in 1 : vector<32x16xbf16>, vector<32x2xbf16> -> vector<32x18xbf16>
    %94 = tpu.concatenate %89, %92, %93 in 0 : vector<32x18xbf16>, vector<32x18xbf16>, vector<32x18xbf16> -> vector<96x18xbf16>
    %c0_29 = arith.constant 0 : index
    %c0_30 = arith.constant 0 : index
    %95 = vector.load %arg6[%c0_29, %c0_30] : memref<64x96xbf16, #tpu.memory_space<vmem>>, vector<64x96xbf16>
    %cst_31 = arith.constant dense<0.000000e+00> : vector<64x18xf32>
    %96 = tpu.matmul %95, %94, %cst_31 {dimension_numbers = #tpu.dot_dimension_numbers<[1], [0], [0], [1], [0, 0, 1, 1], [], []>} : vector<64x96xbf16>, vector<96x18xbf16>, vector<64x18xf32> -> vector<64x18xf32>
    %c0_32 = arith.constant 0 : index
    %c0_33 = arith.constant 0 : index
    %97 = vector.load %arg7[%c0_32, %c0_33] : memref<64x1xf32, #tpu.memory_space<vmem>>, vector<64x1xf32>
    %98 = vector.broadcast %97 : vector<64x1xf32> to vector<64x18xf32>
    %99 = arith.addf %96, %98 : vector<64x18xf32>
    %cst_34 = arith.constant dense<0.000000e+00> : vector<18xf32>
    %100 = vector.multi_reduction <add>, %99, %cst_34 [0] : vector<64x18xf32> to vector<18xf32>
    %101 = vector.shape_cast %100 : vector<18xf32> to vector<1x18xf32>
    %cst_35 = arith.constant 1.562500e-02 : f32
    %102 = vector.broadcast %cst_35 : f32 to vector<1x18xf32>
    %103 = arith.mulf %101, %102 : vector<1x18xf32>
    %104 = arith.mulf %99, %99 : vector<64x18xf32>
    %cst_36 = arith.constant dense<0.000000e+00> : vector<18xf32>
    %105 = vector.multi_reduction <add>, %104, %cst_36 [0] : vector<64x18xf32> to vector<18xf32>
    %106 = vector.shape_cast %105 : vector<18xf32> to vector<1x18xf32>
    %cst_37 = arith.constant 1.562500e-02 : f32
    %107 = vector.broadcast %cst_37 : f32 to vector<1x18xf32>
    %108 = arith.mulf %106, %107 : vector<1x18xf32>
    %109 = arith.mulf %103, %103 : vector<1x18xf32>
    %110 = arith.subf %108, %109 : vector<1x18xf32>
    %cst_38 = arith.constant 0.000000e+00 : f32
    %111 = vector.broadcast %cst_38 : f32 to vector<1x18xf32>
    %112 = arith.maximumf %110, %111 : vector<1x18xf32>
    %113 = vector.broadcast %103 : vector<1x18xf32> to vector<64x18xf32>
    %114 = arith.subf %99, %113 : vector<64x18xf32>
    %cst_39 = arith.constant 9.99999997E-7 : f32
    %115 = vector.broadcast %cst_39 : f32 to vector<1x18xf32>
    %116 = arith.addf %112, %115 : vector<1x18xf32>
    %117 = math.rsqrt %116 : vector<1x18xf32>
    %118 = vector.broadcast %117 : vector<1x18xf32> to vector<64x18xf32>
    %119 = arith.mulf %114, %118 : vector<64x18xf32>
    %120 = vector.broadcast %5 : vector<64x1xf32> to vector<64x18xf32>
    %121 = arith.mulf %119, %120 : vector<64x18xf32>
    %122 = vector.broadcast %6 : vector<64x1xf32> to vector<64x18xf32>
    %123 = arith.addf %121, %122 : vector<64x18xf32>
    %124 = arith.negf %123 : vector<64x18xf32>
    %125 = math.exp %124 : vector<64x18xf32>
    %cst_40 = arith.constant 1.000000e+00 : f32
    %126 = vector.broadcast %cst_40 : f32 to vector<64x18xf32>
    %127 = arith.addf %126, %125 : vector<64x18xf32>
    %128 = arith.divf %126, %127 : vector<64x18xf32>
    %129 = arith.mulf %123, %128 : vector<64x18xf32>
    %c1_i32 = arith.constant 1 : i32
    %130 = arith.subi %0, %c1_i32 : i32
    %131 = tpu.iota {dimensions = array<i32: 1>} : vector<1x18xi32>
    %132 = vector.broadcast %130 : i32 to vector<1x18xi32>
    %133 = arith.addi %132, %131 : vector<1x18xi32>
    %c0_i32_41 = arith.constant 0 : i32
    %134 = vector.broadcast %c0_i32_41 : i32 to vector<1x18xi32>
    %135 = arith.cmpi sge, %133, %134 : vector<1x18xi32>
    %c16_i32_42 = arith.constant 16 : i32
    %136 = vector.broadcast %c16_i32_42 : i32 to vector<1x18xi32>
    %137 = arith.cmpi slt, %133, %136 : vector<1x18xi32>
    %138 = arith.andi %135, %137 : vector<1x18xi1>
    %cst_43 = arith.constant 0.000000e+00 : f32
    %139 = vector.shape_cast %138 : vector<1x18xi1> to vector<1x18xi1>
    %140 = vector.broadcast %139 : vector<1x18xi1> to vector<64x18xi1>
    %141 = vector.broadcast %cst_43 : f32 to vector<64x18xf32>
    %142 = arith.select %140, %129, %141 : vector<64x18xi1>, vector<64x18xf32>
    %143 = arith.truncf %142 : vector<64x18xf32> to vector<64x18xbf16>
    %144 = vector.extract_strided_slice %143 {offsets = [0, 0], sizes = [64, 16], strides = [1, 1]} : vector<64x18xbf16> to vector<64x16xbf16>
    %145 = vector.extract_strided_slice %143 {offsets = [0, 1], sizes = [64, 16], strides = [1, 1]} : vector<64x18xbf16> to vector<64x16xbf16>
    %146 = vector.extract_strided_slice %143 {offsets = [0, 2], sizes = [64, 16], strides = [1, 1]} : vector<64x18xbf16> to vector<64x16xbf16>
    %147 = tpu.concatenate %144, %145, %146 in 0 : vector<64x16xbf16>, vector<64x16xbf16>, vector<64x16xbf16> -> vector<192x16xbf16>
    %c0_44 = arith.constant 0 : index
    %c0_45 = arith.constant 0 : index
    %148 = vector.load %arg10[%c0_44, %c0_45] : memref<64x192xbf16, #tpu.memory_space<vmem>>, vector<64x192xbf16>
    %cst_46 = arith.constant dense<0.000000e+00> : vector<64x16xf32>
    %149 = tpu.matmul %148, %147, %cst_46 {dimension_numbers = #tpu.dot_dimension_numbers<[1], [0], [0], [1], [0, 0, 1, 1], [], []>} : vector<64x192xbf16>, vector<192x16xbf16>, vector<64x16xf32> -> vector<64x16xf32>
    %c0_47 = arith.constant 0 : index
    %c0_48 = arith.constant 0 : index
    %150 = vector.load %arg11[%c0_47, %c0_48] : memref<64x1xf32, #tpu.memory_space<vmem>>, vector<64x1xf32>
    %151 = vector.broadcast %150 : vector<64x1xf32> to vector<64x16xf32>
    %152 = arith.addf %149, %151 : vector<64x16xf32>
    %c0_49 = arith.constant 0 : index
    %c0_50 = arith.constant 0 : index
    %153 = vector.load %arg12[%c0_49, %c0_50] : memref<64x32xbf16, #tpu.memory_space<vmem>>, vector<64x32xbf16>
    %154 = arith.truncf %2 : vector<32x16xf32> to vector<32x16xbf16>
    %cst_51 = arith.constant dense<0.000000e+00> : vector<64x16xf32>
    %155 = tpu.matmul %153, %154, %cst_51 {dimension_numbers = #tpu.dot_dimension_numbers<[1], [0], [0], [1], [0, 0, 1, 1], [], []>} : vector<64x32xbf16>, vector<32x16xbf16>, vector<64x16xf32> -> vector<64x16xf32>
    %c0_52 = arith.constant 0 : index
    %c0_53 = arith.constant 0 : index
    %156 = vector.load %arg13[%c0_52, %c0_53] : memref<64x1xf32, #tpu.memory_space<vmem>>, vector<64x1xf32>
    %157 = vector.broadcast %156 : vector<64x1xf32> to vector<64x16xf32>
    %158 = arith.addf %155, %157 : vector<64x16xf32>
    %159 = arith.addf %158, %152 : vector<64x16xf32>
    %c0_54 = arith.constant 0 : index
    %c0_55 = arith.constant 0 : index
    %c0_56 = arith.constant 0 : index
    %160 = vector.load %arg14[%c0_54, %c0_55, %c0_56] : memref<1x64x16xf32, #tpu.memory_space<vmem>>, vector<1x64x16xf32>
    %161 = vector.shape_cast %160 : vector<1x64x16xf32> to vector<64x16xf32>
    %162 = vector.shape_cast %159 : vector<64x16xf32> to vector<1x64x16xf32>
    tpu.vector_store %arg14[%c0_54, %c0_55, %c0_56], %162 {strides = array<i32>} : memref<1x64x16xf32, #tpu.memory_space<vmem>>, vector<1x64x16xf32>,
    return
  }
  func.func @transform_0(%arg0: i32, %arg1: i32) -> (i32, i32, i32) {
    %c0_i32 = arith.constant 0 : i32
    %c0_i32_0 = arith.constant 0 : i32
    return %arg0, %c0_i32, %arg1 : i32, i32, i32
  }
  func.func @transform_1(%arg0: i32, %arg1: i32) -> (i32, i32, i32, i32) {
    %c0_i32 = arith.constant 0 : i32
    %c0_i32_0 = arith.constant 0 : i32
    %c0_i32_1 = arith.constant 0 : i32
    return %arg0, %arg1, %c0_i32, %c0_i32_0 : i32, i32, i32, i32
  }
  func.func @transform_2(%arg0: i32, %arg1: i32) -> (i32, i32) {
    %c0_i32 = arith.constant 0 : i32
    %c0_i32_0 = arith.constant 0 : i32
    %c0_i32_1 = arith.constant 0 : i32
    return %c0_i32, %c0_i32_0 : i32, i32
  }
  func.func @transform_3(%arg0: i32, %arg1: i32) -> (i32, i32) {
    %c0_i32 = arith.constant 0 : i32
    %c0_i32_0 = arith.constant 0 : i32
    %c0_i32_1 = arith.constant 0 : i32
    return %c0_i32, %c0_i32_0 : i32, i32
  }
  func.func @transform_4(%arg0: i32, %arg1: i32) -> (i32, i32) {
    %c0_i32 = arith.constant 0 : i32
    %c0_i32_0 = arith.constant 0 : i32
    %c0_i32_1 = arith.constant 0 : i32
    return %c0_i32, %c0_i32_0 : i32, i32
  }
  func.func @transform_5(%arg0: i32, %arg1: i32) -> (i32, i32) {
    %c0_i32 = arith.constant 0 : i32
    %c0_i32_0 = arith.constant 0 : i32
    %c0_i32_1 = arith.constant 0 : i32
    return %c0_i32, %c0_i32_0 : i32, i32
  }
  func.func @transform_6(%arg0: i32, %arg1: i32) -> (i32, i32) {
    %c0_i32 = arith.constant 0 : i32
    %c0_i32_0 = arith.constant 0 : i32
    %c0_i32_1 = arith.constant 0 : i32
    return %c0_i32, %c0_i32_0 : i32, i32
  }
  func.func @transform_7(%arg0: i32, %arg1: i32) -> (i32, i32) {
    %c0_i32 = arith.constant 0 : i32
    %c0_i32_0 = arith.constant 0 : i32
    %c0_i32_1 = arith.constant 0 : i32
    return %c0_i32, %c0_i32_0 : i32, i32
  }
  func.func @transform_8(%arg0: i32, %arg1: i32) -> (i32, i32) {
    %c0_i32 = arith.constant 0 : i32
    %c0_i32_0 = arith.constant 0 : i32
    %c0_i32_1 = arith.constant 0 : i32
    return %c0_i32, %c0_i32_0 : i32, i32
  }
  func.func @transform_9(%arg0: i32, %arg1: i32) -> (i32, i32) {
    %c0_i32 = arith.constant 0 : i32
    %c0_i32_0 = arith.constant 0 : i32
    %c0_i32_1 = arith.constant 0 : i32
    return %c0_i32, %c0_i32_0 : i32, i32
  }
  func.func @transform_10(%arg0: i32, %arg1: i32) -> (i32, i32) {
    %c0_i32 = arith.constant 0 : i32
    %c0_i32_0 = arith.constant 0 : i32
    %c0_i32_1 = arith.constant 0 : i32
    return %c0_i32, %c0_i32_0 : i32, i32
  }
  func.func @transform_11(%arg0: i32, %arg1: i32) -> (i32, i32) {
    %c0_i32 = arith.constant 0 : i32
    %c0_i32_0 = arith.constant 0 : i32
    %c0_i32_1 = arith.constant 0 : i32
    return %c0_i32, %c0_i32_0 : i32, i32
  }
  func.func @transform_12(%arg0: i32, %arg1: i32) -> (i32, i32, i32) {
    %c0_i32 = arith.constant 0 : i32
    %c0_i32_0 = arith.constant 0 : i32
    return %arg0, %c0_i32, %arg1 : i32, i32, i32
  }
}

</mosaic_0001>

<llo_original>
// kernel: tpu_custom_call.1
$region0: #{tpu_custom_call.1}
  #allocation0 [shape = 'u32[]', space=smem, size = 0x4, offset = 0x4, fixed_abs, tag = 'smem constant byte address 0x4 - core index']
  #allocation1 [shape = 'u32[144,128]{1,0:T(1,128)}', space=vmem, size = 0x12000, scoped, tag = 'internal scratch']
  %s0 = inlined_call_operand.vmem [shape: f32[2,32,16], index: 0, kind: input, shape index: {}]
  %s1 = inlined_call_operand.vmem [shape: f32[2,1,32,4], index: 1, kind: input, shape index: {}]
  %s2 = inlined_call_operand.vmem [shape: f32[32,1], index: 2, kind: input, shape index: {}]
  %s3 = inlined_call_operand.vmem [shape: f32[32,1], index: 3, kind: input, shape index: {}]
  %s4 = inlined_call_operand.vmem [shape: bf16[64,96], index: 4, kind: input, shape index: {}]
  %s5 = inlined_call_operand.vmem [shape: f32[64,1], index: 5, kind: input, shape index: {}]
  %s6 = inlined_call_operand.vmem [shape: f32[64,1], index: 6, kind: input, shape index: {}]
  %s7 = inlined_call_operand.vmem [shape: f32[64,1], index: 7, kind: input, shape index: {}]
  %s8 = inlined_call_operand.vmem [shape: bf16[64,192], index: 8, kind: input, shape index: {}]
  %s9 = inlined_call_operand.vmem [shape: f32[64,1], index: 9, kind: input, shape index: {}]
  %s10 = inlined_call_operand.vmem [shape: bf16[64,32], index: 10, kind: input, shape index: {}]
  %s11 = inlined_call_operand.vmem [shape: f32[64,1], index: 11, kind: input, shape index: {}]
  %s12 = inlined_call_operand.vmem [shape: f32[2,64,16], index: 12, kind: output, shape index: {}]
  %s13 = sld [smem:[#allocation0]]
  $region81: #{tpu_custom_call.1} parent=0
    _
  %s15 = ssub.s32 1, %s13
  %s16 = scalar_select 0, %s15, %s13
  loop: start=0, step=1, limit=4
  $region2: #{tpu_custom_call.1} parent=0 // loop_pre_header
    _
  $region3: #{tpu_custom_call.1} parent=0 // loop_header
    %s18 = sphi 0, %s22
    %p19 = scmp.ge.s32.totalorder %s18, 4
    %s25 = sphi 0, %s37
    %s26 = sphi 0, %s33
    %s27 = sphi 0, %s25
    %s28 = sphi 0, %s26
    %s29 = sphi 0, %s27
    %s30 = sphi 0, %s28
    %s42 = sphi 0, %s44
    %s45 = sphi 0, %s42
    %s46 = sphi 0, %s45
    %s62 = sphi 0, %s46
    %s70 = sphi 0, %s72
    %s73 = sphi 0, %s70
    %s74 = sphi 0, %s73
    %s90 = sphi 0, %s74
    %s94 = sphi 0, %s94
    %s96 = sphi 0, %s94
    %s97 = sphi 0, %s96
    %s111 = sphi 0, %s97
    %s115 = sphi 0, %s115
    %s117 = sphi 0, %s115
    %s118 = sphi 0, %s117
    %s132 = sphi 0, %s118
    %s136 = sphi 0, %s136
    %s138 = sphi 0, %s136
    %s139 = sphi 0, %s138
    %s153 = sphi 0, %s139
    %s157 = sphi 0, %s157
    %s159 = sphi 0, %s157
    %s160 = sphi 0, %s159
    %s174 = sphi 0, %s160
    %s178 = sphi 0, %s178
    %s180 = sphi 0, %s178
    %s181 = sphi 0, %s180
    %s195 = sphi 0, %s181
    %s199 = sphi 0, %s199
    %s201 = sphi 0, %s199
    %s202 = sphi 0, %s201
    %s216 = sphi 0, %s202
    %s220 = sphi 0, %s220
    %s222 = sphi 0, %s220
    %s223 = sphi 0, %s222
    %s237 = sphi 0, %s223
    %s241 = sphi 0, %s241
    %s243 = sphi 0, %s241
    %s244 = sphi 0, %s243
    %s258 = sphi 0, %s244
    %s262 = sphi 0, %s262
    %s264 = sphi 0, %s262
    %s265 = sphi 0, %s264
    %s279 = sphi 0, %s265
    %s283 = sphi 0, %s283
    %s285 = sphi 0, %s283
    %s286 = sphi 0, %s285
    %s300 = sphi 0, %s286
    %s308 = sphi 0, %s310
    %s311 = sphi 0, %s308
    %s312 = sphi 0, %s311
    %s328 = sphi 0, %s312
  $region4: #{tpu_custom_call.1} parent=0 // loop_header_branch
    %21 = sbr.rel (%p19) target = $region8
  $region5: #{tpu_custom_call.1} parent=0 // loop_body
    %s23 = ssub.s32 %s18, 1
    %s24 = ssub.s32 %s18, 2
    %s31 = sadd.s32 1, %s26
    %p32 = scmp.ge.s32.totalorder %s31, 1
    %s33 = scalar_select %p32, 0, %s31
    %s34 = sadd.s32 1, %s25
    %s35 = scalar_select %p32, %s34, %s25
    %p36 = scmp.ge.s32.totalorder %s35, 2
    %s37 = scalar_select %p36, 0, %s35
    %s38 = ssub.s32 %s25, %s37
    %s39 = ssub.s32 %s26, %s33
    %s40 = sor.u32 %s38, %s39
    %p41 = scmp.eq.s32.totalorder %s40, 0
    %s43 = sadd.s32 %s42, 1
    %s44 = scalar_select %p41, %s42, %s43
    %p47 = pneg %p41
    %p48 = scmp.eq.s32.totalorder %s18, 1
    %p49 = por %p47, %p48
    %p50 = scmp.ne.s32.totalorder %s42, %s45
    %p51 = scmp.eq.s32.totalorder %s18, 0
    %p52 = por %p50, %p51
    %p53 = scmp.ne.s32.totalorder %s42, %s45
    %p54 = scmp.eq.s32.totalorder %s23, 1
    %p55 = por %p53, %p54
    %p56 = scmp.ne.s32.totalorder %s45, %s46
    %p57 = scmp.eq.s32.totalorder %s23, 0
    %p58 = por %p56, %p57
    %p59 = scmp.ne.s32.totalorder %s45, %s46
    %p60 = scmp.eq.s32.totalorder %s24, 1
    %p61 = por %p59, %p60
    %p63 = scmp.ne.s32.totalorder %s46, %s62
    %p64 = scmp.eq.s32.totalorder %s24, 0
    %p65 = por %p63, %p64
    %s66 = ssub.s32 %s25, %s37
    %s67 = ssub.s32 %s26, %s33
    %s68 = sor.u32 %s66, %s67
    %p69 = scmp.eq.s32.totalorder %s68, 0
    %s71 = sadd.s32 %s70, 1
    %s72 = scalar_select %p69, %s70, %s71
    %p75 = pneg %p69
    %p76 = scmp.eq.s32.totalorder %s18, 1
    %p77 = por %p75, %p76
    %p78 = scmp.ne.s32.totalorder %s70, %s73
    %p79 = scmp.eq.s32.totalorder %s18, 0
    %p80 = por %p78, %p79
    %p81 = scmp.ne.s32.totalorder %s70, %s73
    %p82 = scmp.eq.s32.totalorder %s23, 1
    %p83 = por %p81, %p82
    %p84 = scmp.ne.s32.totalorder %s73, %s74
    %p85 = scmp.eq.s32.totalorder %s23, 0
    %p86 = por %p84, %p85
    %p87 = scmp.ne.s32.totalorder %s73, %s74
    %p88 = scmp.eq.s32.totalorder %s24, 1
    %p89 = por %p87, %p88
    %p91 = scmp.ne.s32.totalorder %s74, %s90
    %p92 = scmp.eq.s32.totalorder %s24, 0
    %p93 = por %p91, %p92
    %s95 = sadd.s32 %s94, 1
    %p98 = scmp.eq.s32.totalorder %s18, 1
    %p99 = scmp.ne.s32.totalorder %s94, %s96
    %p100 = scmp.eq.s32.totalorder %s18, 0
    %p101 = por %p99, %p100
    %p102 = scmp.ne.s32.totalorder %s94, %s96
    %p103 = scmp.eq.s32.totalorder %s23, 1
    %p104 = por %p102, %p103
    %p105 = scmp.ne.s32.totalorder %s96, %s97
    %p106 = scmp.eq.s32.totalorder %s23, 0
    %p107 = por %p105, %p106
    %p108 = scmp.ne.s32.totalorder %s96, %s97
    %p109 = scmp.eq.s32.totalorder %s24, 1
    %p110 = por %p108, %p109
    %p112 = scmp.ne.s32.totalorder %s97, %s111
    %p113 = scmp.eq.s32.totalorder %s24, 0
    %p114 = por %p112, %p113
    %s116 = sadd.s32 %s115, 1
    %p119 = scmp.eq.s32.totalorder %s18, 1
    %p120 = scmp.ne.s32.totalorder %s115, %s117
    %p121 = scmp.eq.s32.totalorder %s18, 0
    %p122 = por %p120, %p121
    %p123 = scmp.ne.s32.totalorder %s115, %s117
    %p124 = scmp.eq.s32.totalorder %s23, 1
    %p125 = por %p123, %p124
    %p126 = scmp.ne.s32.totalorder %s117, %s118
    %p127 = scmp.eq.s32.totalorder %s23, 0
    %p128 = por %p126, %p127
    %p129 = scmp.ne.s32.totalorder %s117, %s118
    %p130 = scmp.eq.s32.totalorder %s24, 1
    %p131 = por %p129, %p130
    %p133 = scmp.ne.s32.totalorder %s118, %s132
    %p134 = scmp.eq.s32.totalorder %s24, 0
    %p135 = por %p133, %p134
    %s137 = sadd.s32 %s136, 1
    %p140 = scmp.eq.s32.totalorder %s18, 1
    %p141 = scmp.ne.s32.totalorder %s136, %s138
    %p142 = scmp.eq.s32.totalorder %s18, 0
    %p143 = por %p141, %p142
    %p144 = scmp.ne.s32.totalorder %s136, %s138
    %p145 = scmp.eq.s32.totalorder %s23, 1
    %p146 = por %p144, %p145
    %p147 = scmp.ne.s32.totalorder %s138, %s139
    %p148 = scmp.eq.s32.totalorder %s23, 0
    %p149 = por %p147, %p148
    %p150 = scmp.ne.s32.totalorder %s138, %s139
    %p151 = scmp.eq.s32.totalorder %s24, 1
    %p152 = por %p150, %p151
    %p154 = scmp.ne.s32.totalorder %s139, %s153
    %p155 = scmp.eq.s32.totalorder %s24, 0
    %p156 = por %p154, %p155
    %s158 = sadd.s32 %s157, 1
    %p161 = scmp.eq.s32.totalorder %s18, 1
    %p162 = scmp.ne.s32.totalorder %s157, %s159
    %p163 = scmp.eq.s32.totalorder %s18, 0
    %p164 = por %p162, %p163
    %p165 = scmp.ne.s32.totalorder %s157, %s159
    %p166 = scmp.eq.s32.totalorder %s23, 1
    %p167 = por %p165, %p166
    %p168 = scmp.ne.s32.totalorder %s159, %s160
    %p169 = scmp.eq.s32.totalorder %s23, 0
    %p170 = por %p168, %p169
    %p171 = scmp.ne.s32.totalorder %s159, %s160
    %p172 = scmp.eq.s32.totalorder %s24, 1
    %p173 = por %p171, %p172
    %p175 = scmp.ne.s32.totalorder %s160, %s174
    %p176 = scmp.eq.s32.totalorder %s24, 0
    %p177 = por %p175, %p176
    %s179 = sadd.s32 %s178, 1
    %p182 = scmp.eq.s32.totalorder %s18, 1
    %p183 = scmp.ne.s32.totalorder %s178, %s180
    %p184 = scmp.eq.s32.totalorder %s18, 0
    %p185 = por %p183, %p184
    %p186 = scmp.ne.s32.totalorder %s178, %s180
    %p187 = scmp.eq.s32.totalorder %s23, 1
    %p188 = por %p186, %p187
    %p189 = scmp.ne.s32.totalorder %s180, %s181
    %p190 = scmp.eq.s32.totalorder %s23, 0
    %p191 = por %p189, %p190
    %p192 = scmp.ne.s32.totalorder %s180, %s181
    %p193 = scmp.eq.s32.totalorder %s24, 1
    %p194 = por %p192, %p193
    %p196 = scmp.ne.s32.totalorder %s181, %s195
    %p197 = scmp.eq.s32.totalorder %s24, 0
    %p198 = por %p196, %p197
    %s200 = sadd.s32 %s199, 1
    %p203 = scmp.eq.s32.totalorder %s18, 1
    %p204 = scmp.ne.s32.totalorder %s199, %s201
    %p205 = scmp.eq.s32.totalorder %s18, 0
    %p206 = por %p204, %p205
    %p207 = scmp.ne.s32.totalorder %s199, %s201
    %p208 = scmp.eq.s32.totalorder %s23, 1
    %p209 = por %p207, %p208
    %p210 = scmp.ne.s32.totalorder %s201, %s202
    %p211 = scmp.eq.s32.totalorder %s23, 0
    %p212 = por %p210, %p211
    %p213 = scmp.ne.s32.totalorder %s201, %s202
    %p214 = scmp.eq.s32.totalorder %s24, 1
    %p215 = por %p213, %p214
    %p217 = scmp.ne.s32.totalorder %s202, %s216
    %p218 = scmp.eq.s32.totalorder %s24, 0
    %p219 = por %p217, %p218
    %s221 = sadd.s32 %s220, 1
    %p224 = scmp.eq.s32.totalorder %s18, 1
    %p225 = scmp.ne.s32.totalorder %s220, %s222
    %p226 = scmp.eq.s32.totalorder %s18, 0
    %p227 = por %p225, %p226
    %p228 = scmp.ne.s32.totalorder %s220, %s222
    %p229 = scmp.eq.s32.totalorder %s23, 1
    %p230 = por %p228, %p229
    %p231 = scmp.ne.s32.totalorder %s222, %s223
    %p232 = scmp.eq.s32.totalorder %s23, 0
    %p233 = por %p231, %p232
    %p234 = scmp.ne.s32.totalorder %s222, %s223
    %p235 = scmp.eq.s32.totalorder %s24, 1
    %p236 = por %p234, %p235
    %p238 = scmp.ne.s32.totalorder %s223, %s237
    %p239 = scmp.eq.s32.totalorder %s24, 0
    %p240 = por %p238, %p239
    %s242 = sadd.s32 %s241, 1
    %p245 = scmp.eq.s32.totalorder %s18, 1
    %p246 = scmp.ne.s32.totalorder %s241, %s243
    %p247 = scmp.eq.s32.totalorder %s18, 0
    %p248 = por %p246, %p247
    %p249 = scmp.ne.s32.totalorder %s241, %s243
    %p250 = scmp.eq.s32.totalorder %s23, 1
    %p251 = por %p249, %p250
    %p252 = scmp.ne.s32.totalorder %s243, %s244
    %p253 = scmp.eq.s32.totalorder %s23, 0
    %p254 = por %p252, %p253
    %p255 = scmp.ne.s32.totalorder %s243, %s244
    %p256 = scmp.eq.s32.totalorder %s24, 1
    %p257 = por %p255, %p256
    %p259 = scmp.ne.s32.totalorder %s244, %s258
    %p260 = scmp.eq.s32.totalorder %s24, 0
    %p261 = por %p259, %p260
    %s263 = sadd.s32 %s262, 1
    %p266 = scmp.eq.s32.totalorder %s18, 1
    %p267 = scmp.ne.s32.totalorder %s262, %s264
    %p268 = scmp.eq.s32.totalorder %s18, 0
    %p269 = por %p267, %p268
    %p270 = scmp.ne.s32.totalorder %s262, %s264
    %p271 = scmp.eq.s32.totalorder %s23, 1
    %p272 = por %p270, %p271
    %p273 = scmp.ne.s32.totalorder %s264, %s265
    %p274 = scmp.eq.s32.totalorder %s23, 0
    %p275 = por %p273, %p274
    %p276 = scmp.ne.s32.totalorder %s264, %s265
    %p277 = scmp.eq.s32.totalorder %s24, 1
    %p278 = por %p276, %p277
    %p280 = scmp.ne.s32.totalorder %s265, %s279
    %p281 = scmp.eq.s32.totalorder %s24, 0
    %p282 = por %p280, %p281
    %s284 = sadd.s32 %s283, 1
    %p287 = scmp.eq.s32.totalorder %s18, 1
    %p288 = scmp.ne.s32.totalorder %s283, %s285
    %p289 = scmp.eq.s32.totalorder %s18, 0
    %p290 = por %p288, %p289
    %p291 = scmp.ne.s32.totalorder %s283, %s285
    %p292 = scmp.eq.s32.totalorder %s23, 1
    %p293 = por %p291, %p292
    %p294 = scmp.ne.s32.totalorder %s285, %s286
    %p295 = scmp.eq.s32.totalorder %s23, 0
    %p296 = por %p294, %p295
    %p297 = scmp.ne.s32.totalorder %s285, %s286
    %p298 = scmp.eq.s32.totalorder %s24, 1
    %p299 = por %p297, %p298
    %p301 = scmp.ne.s32.totalorder %s286, %s300
    %p302 = scmp.eq.s32.totalorder %s24, 0
    %p303 = por %p301, %p302
    %s304 = ssub.s32 %s25, %s37
    %s305 = ssub.s32 %s26, %s33
    %s306 = sor.u32 %s304, %s305
    %p307 = scmp.eq.s32.totalorder %s306, 0
    %s309 = sadd.s32 %s308, 1
    %s310 = scalar_select %p307, %s308, %s309
    %p313 = pneg %p307
    %p314 = scmp.eq.s32.totalorder %s18, 1
    %p315 = por %p313, %p314
    %p316 = scmp.ne.s32.totalorder %s308, %s311
    %p317 = scmp.eq.s32.totalorder %s18, 0
    %p318 = por %p316, %p317
    %p319 = scmp.ne.s32.totalorder %s308, %s311
    %p320 = scmp.eq.s32.totalorder %s23, 1
    %p321 = por %p319, %p320
    %p322 = scmp.ne.s32.totalorder %s311, %s312
    %p323 = scmp.eq.s32.totalorder %s23, 0
    %p324 = por %p322, %p323
    %p325 = scmp.ne.s32.totalorder %s311, %s312
    %p326 = scmp.eq.s32.totalorder %s24, 1
    %p327 = por %p325, %p326
    %p329 = scmp.ne.s32.totalorder %s312, %s328
    %p330 = scmp.eq.s32.totalorder %s24, 0
    %p331 = por %p329, %p330
    %p332 = scmp.le.s32.totalorder 1, %s18
    %p333 = scmp.lt.s32.totalorder %s18, 3
    %p334 = pnand %p332, %p333
    %p335 = pneg %p334
    // Predicated region
    $region9: #{tpu_custom_call.1} parent=5 // pred_check
      _
    $region10: #{tpu_custom_call.1} parent=5 // pred_check_branch
      %337 = sbr.rel (%p334) target = $region12
    $region11: #{tpu_custom_call.1} parent=5 // pred_region
      %s338 = ssub.s32 %s18, 1
      // Predicated region
      $region13: #{tpu_custom_call.1} parent=11 // pred_check
        %p339 = pneg %p107
      $region14: #{tpu_custom_call.1} parent=11 // pred_check_branch
        %341 = sbr.rel (%p339) target = $region16
      $region15: #{tpu_custom_call.1} parent=11 // pred_region
        _
      $region16: #{tpu_custom_call.1} parent=11 // pred_fallthru
        _
      // Predicated region
      $region17: #{tpu_custom_call.1} parent=11 // pred_check
        %p342 = pneg %p128
      $region18: #{tpu_custom_call.1} parent=11 // pred_check_branch
        %344 = sbr.rel (%p342) target = $region20
      $region19: #{tpu_custom_call.1} parent=11 // pred_region
        _
      $region20: #{tpu_custom_call.1} parent=11 // pred_fallthru
        _
      // Predicated region
      $region21: #{tpu_custom_call.1} parent=11 // pred_check
        %p345 = pneg %p149
      $region22: #{tpu_custom_call.1} parent=11 // pred_check_branch
        %347 = sbr.rel (%p345) target = $region24
      $region23: #{tpu_custom_call.1} parent=11 // pred_region
        _
      $region24: #{tpu_custom_call.1} parent=11 // pred_fallthru
        _
      // Predicated region
      $region25: #{tpu_custom_call.1} parent=11 // pred_check
        %p348 = pneg %p170
      $region26: #{tpu_custom_call.1} parent=11 // pred_check_branch
        %350 = sbr.rel (%p348) target = $region28
      $region27: #{tpu_custom_call.1} parent=11 // pred_region
        _
      $region28: #{tpu_custom_call.1} parent=11 // pred_fallthru
        _
      // Predicated region
      $region29: #{tpu_custom_call.1} parent=11 // pred_check
        %p351 = pneg %p191
      $region30: #{tpu_custom_call.1} parent=11 // pred_check_branch
        %353 = sbr.rel (%p351) target = $region32
      $region31: #{tpu_custom_call.1} parent=11 // pred_region
        _
      $region32: #{tpu_custom_call.1} parent=11 // pred_fallthru
        _
      // Predicated region
      $region33: #{tpu_custom_call.1} parent=11 // pred_check
        %p354 = pneg %p212
      $region34: #{tpu_custom_call.1} parent=11 // pred_check_branch
        %356 = sbr.rel (%p354) target = $region36
      $region35: #{tpu_custom_call.1} parent=11 // pred_region
        _
      $region36: #{tpu_custom_call.1} parent=11 // pred_fallthru
        _
      // Predicated region
      $region37: #{tpu_custom_call.1} parent=11 // pred_check
        %p357 = pneg %p233
      $region38: #{tpu_custom_call.1} parent=11 // pred_check_branch
        %359 = sbr.rel (%p357) target = $region40
      $region39: #{tpu_custom_call.1} parent=11 // pred_region
        _
      $region40: #{tpu_custom_call.1} parent=11 // pred_fallthru
        _
      // Predicated region
      $region41: #{tpu_custom_call.1} parent=11 // pred_check
        %p360 = pneg %p254
      $region42: #{tpu_custom_call.1} parent=11 // pred_check_branch
        %362 = sbr.rel (%p360) target = $region44
      $region43: #{tpu_custom_call.1} parent=11 // pred_region
        _
      $region44: #{tpu_custom_call.1} parent=11 // pred_fallthru
        _
      // Predicated region
      $region45: #{tpu_custom_call.1} parent=11 // pred_check
        %p363 = pneg %p275
      $region46: #{tpu_custom_call.1} parent=11 // pred_check_branch
        %365 = sbr.rel (%p363) target = $region48
      $region47: #{tpu_custom_call.1} parent=11 // pred_region
        _
      $region48: #{tpu_custom_call.1} parent=11 // pred_fallthru
        _
      // Predicated region
      $region49: #{tpu_custom_call.1} parent=11 // pred_check
        %p366 = pneg %p296
      $region50: #{tpu_custom_call.1} parent=11 // pred_check_branch
        %368 = sbr.rel (%p366) target = $region52
      $region51: #{tpu_custom_call.1} parent=11 // pred_region
        _
      $region52: #{tpu_custom_call.1} parent=11 // pred_fallthru
        _
    $region12: #{tpu_custom_call.1} parent=5 // pred_fallthru
      _
    %p369 = scmp.lt.s32.totalorder %s18, 2
    // Predicated region
    $region53: #{tpu_custom_call.1} parent=5 // pred_check
      %p370 = pneg %p369
    $region54: #{tpu_custom_call.1} parent=5 // pred_check_branch
      %372 = sbr.rel (%p370) target = $region56
    $region55: #{tpu_custom_call.1} parent=5 // pred_region
      // Predicated region
      $region57: #{tpu_custom_call.1} parent=55 // pred_check
        %p373 = pneg %p52
      $region58: #{tpu_custom_call.1} parent=55 // pred_check_branch
        %375 = sbr.rel (%p373) target = $region60
      $region59: #{tpu_custom_call.1} parent=55 // pred_region
        %p376 = scmp.lt.s32.totalorder %s25, 1
        %s377 = scalar_select %p376, %s25, 1
        %p378 = scmp.lt.s32.totalorder %s26, 0
        %s379 = scalar_select %p378, %s26, 0
        %s380 = smul.addr %s377, 4
        %s381 = sadd.s32 %s379, %s380
        %s382 = smul.addr %s381, 8
        %s383 = scalar_lea.vmem %s0, %s382
      $region60: #{tpu_custom_call.1} parent=55 // pred_fallthru
        _
      // Predicated region
      $region61: #{tpu_custom_call.1} parent=55 // pred_check
        %p384 = pneg %p80
      $region62: #{tpu_custom_call.1} parent=55 // pred_check_branch
        %386 = sbr.rel (%p384) target = $region64
      $region63: #{tpu_custom_call.1} parent=55 // pred_region
        %p387 = scmp.lt.s32.totalorder %s25, 1
        %s388 = scalar_select %p387, %s25, 1
        %p389 = scmp.lt.s32.totalorder %s26, 0
        %s390 = scalar_select %p389, %s26, 0
        %s391 = smul.addr %s390, 4
        %s392 = smul.addr %s388, 4
        %s393 = sadd.s32 %s391, %s392
        %s394 = smul.addr %s393, 8
        %s395 = scalar_lea.vmem %s1, %s394
      $region64: #{tpu_custom_call.1} parent=55 // pred_fallthru
        _
    $region56: #{tpu_custom_call.1} parent=5 // pred_fallthru
      _
    %p396 = scmp.le.s32.totalorder 1, %s18
    %p397 = scmp.lt.s32.totalorder %s18, 3
    %p398 = pnand %p396, %p397
    %p399 = pneg %p398
    // Predicated region
    $region65: #{tpu_custom_call.1} parent=5 // pred_check
      _
    $region66: #{tpu_custom_call.1} parent=5 // pred_check_branch
      %401 = sbr.rel (%p398) target = $region68
    $region67: #{tpu_custom_call.1} parent=5 // pred_region
      %s402 = ssub.s32 %s18, 1
      %p403 = scmp.lt.s32.totalorder %s27, 1
      %s404 = scalar_select %p403, %s27, 1
      %p405 = scmp.lt.s32.totalorder %s28, 0
      %s406 = scalar_select %p405, %s28, 0
      %s407 = smul.addr %s404, 4
      %s408 = sadd.s32 %s406, %s407
      %s409 = smul.addr %s408, 8
      %s410 = scalar_lea.vmem %s0, %s409
      %p411 = pneg %p58
      %p412 = pneg %p55
      %p413 = scmp.lt.s32.totalorder %s27, 1
      %s414 = scalar_select %p413, %s27, 1
      %p415 = scmp.lt.s32.totalorder %s28, 0
      %s416 = scalar_select %p415, %s28, 0
      %s417 = smul.addr %s416, 4
      %s418 = smul.addr %s414, 4
      %s419 = sadd.s32 %s417, %s418
      %s420 = smul.addr %s419, 8
      %s421 = scalar_lea.vmem %s1, %s420
      %p422 = pneg %p86
      %p423 = pneg %p83
      %p424 = pneg %p107
      %p425 = pneg %p104
      %p426 = pneg %p128
      %p427 = pneg %p125
      %p428 = pneg %p149
      %p429 = pneg %p146
      %p430 = pneg %p170
      %p431 = pneg %p167
      %p432 = pneg %p191
      %p433 = pneg %p188
      %p434 = pneg %p212
      %p435 = pneg %p209
      %p436 = pneg %p233
      %p437 = pneg %p230
      %p438 = pneg %p254
      %p439 = pneg %p251
      %p440 = pneg %p275
      %p441 = pneg %p272
      %p442 = pneg %p296
      %p443 = pneg %p293
      %p444 = pneg %p324
      %p445 = pneg %p321
      %p446 = scmp.lt.s32.totalorder %s27, 1
      %s447 = scalar_select %p446, %s27, 1
      %p448 = scmp.lt.s32.totalorder %s28, 0
      %s449 = scalar_select %p448, %s28, 0
      %s450 = smul.addr %s447, 8
      %s451 = sadd.s32 %s449, %s450
      %s452 = smul.addr %s451, 8
      %s453 = scalar_lea.vmem %s12, %s452
      %p454 = scmp.lt.s32.totalorder %s27, 1
      %s455 = scalar_select %p454, %s27, 1
      %p456 = scmp.lt.s32.totalorder %s28, 0
      %s457 = scalar_select %p456, %s28, 0
      %s458 = smul.addr %s455, 4
      %s459 = sadd.s32 %s457, %s458
      %s460 = smul.addr %s459, 8
      %s461 = scalar_lea.vmem %s0, %s460
      %p462 = scmp.lt.s32.totalorder %s27, 1
      %s463 = scalar_select %p462, %s27, 1
      %p464 = scmp.lt.s32.totalorder %s28, 0
      %s465 = scalar_select %p464, %s28, 0
      %s466 = smul.addr %s465, 4
      %s467 = smul.addr %s463, 4
      %s468 = sadd.s32 %s466, %s467
      %s469 = smul.addr %s468, 8
      %s470 = scalar_lea.vmem %s1, %s469
      %p471 = scmp.lt.s32.totalorder %s27, 1
      %s472 = scalar_select %p471, %s27, 1
      %p473 = scmp.lt.s32.totalorder %s28, 0
      %s474 = scalar_select %p473, %s28, 0
      %s475 = smul.addr %s472, 8
      %s476 = sadd.s32 %s474, %s475
      %s477 = smul.addr %s476, 8
      %s478 = scalar_lea.vmem %s12, %s477
      %s480 = smul.u32 %s28, 16
      %v481 = vld [vmem:[%s461] sm:$0xff]
      %v482 = vld [vmem:[%s461 + $0x8] sm:$0xff]
      %v483 = vld [vmem:[%s461 + $0x10] sm:$0xff]
      %v484 = vld [vmem:[%s461 + $0x18] sm:$0xff]
      %v485 = vld [vmem:[%s2] sm:$0xff]
      %v486 = vld [vmem:[%s2 + $0x8] sm:$0xff]
      %v487 = vld [vmem:[%s2 + $0x10] sm:$0xff]
      %v488 = vld [vmem:[%s2 + $0x18] sm:$0xff]
      %v489 = vld [vmem:[%s3] sm:$0xff]
      %v490 = vld [vmem:[%s3 + $0x8] sm:$0xff]
      %v491 = vld [vmem:[%s3 + $0x10] sm:$0xff]
      %v492 = vld [vmem:[%s3 + $0x18] sm:$0xff]
      %v493 = vld [vmem:[%s6] sm:$0xff]
      %v494 = vld [vmem:[%s6 + $0x8] sm:$0xff]
      %v495 = vld [vmem:[%s6 + $0x10] sm:$0xff]
      %v496 = vld [vmem:[%s6 + $0x18] sm:$0xff]
      %v497 = vld [vmem:[%s6 + $0x20] sm:$0xff]
      %v498 = vld [vmem:[%s6 + $0x28] sm:$0xff]
      %v499 = vld [vmem:[%s6 + $0x30] sm:$0xff]
      %v500 = vld [vmem:[%s6 + $0x38] sm:$0xff]
      %v501 = vld [vmem:[%s7] sm:$0xff]
      %v502 = vld [vmem:[%s7 + $0x8] sm:$0xff]
      %v503 = vld [vmem:[%s7 + $0x10] sm:$0xff]
      %v504 = vld [vmem:[%s7 + $0x18] sm:$0xff]
      %v505 = vld [vmem:[%s7 + $0x20] sm:$0xff]
      %v506 = vld [vmem:[%s7 + $0x28] sm:$0xff]
      %v507 = vld [vmem:[%s7 + $0x30] sm:$0xff]
      %v508 = vld [vmem:[%s7 + $0x38] sm:$0xff]
      %vm509 = vcmask 130048
      %v510 = vsel %vm509, %v481, 0.0
      %v511 = vsel %vm509, %v482, 0.0
      %v512 = vadd.f32 %v510, %v511
      %v513 = vsel %vm509, %v483, 0.0
      %v514 = vadd.f32 %v512, %v513
      %v515 = vsel %vm509, %v484, 0.0
      %v516 = vadd.f32 %v514, %v515
      %v517 = vrot.slane %v516, 4
      %v518 = vadd.f32 %v516, %v517
      %v519 = vrot.slane %v518, 2
      %v520 = vadd.f32 %v518, %v519
      %v521 = vrot.slane %v520, 1
      %v522 = vadd.f32 %v520, %v521
      %v523 = vmul.f32 %v522, 0.03125
      %v524 = vmul.f32 %v481, %v481
      %v525 = vmul.f32 %v482, %v482
      %v526 = vmul.f32 %v483, %v483
      %v527 = vmul.f32 %v484, %v484
      %v528 = vsel %vm509, %v524, 0.0
      %v529 = vsel %vm509, %v525, 0.0
      %v530 = vadd.f32 %v528, %v529
      %v531 = vsel %vm509, %v526, 0.0
      %v532 = vadd.f32 %v530, %v531
      %v533 = vsel %vm509, %v527, 0.0
      %v534 = vadd.f32 %v532, %v533
      %v535 = vrot.slane %v534, 4
      %v536 = vadd.f32 %v534, %v535
      %v537 = vrot.slane %v536, 2
      %v538 = vadd.f32 %v536, %v537
      %v539 = vrot.slane %v538, 1
      %v540 = vadd.f32 %v538, %v539
      %v541 = vmul.f32 %v540, 0.03125
      %v542 = vmul.f32 %v523, %v523
      %v543 = vsub.f32 %v541, %v542
      %v544 = vmax.f32 %v543, 0.0
      %v545 = vsub.f32 %v481, %v523
      %v546 = vsub.f32 %v482, %v523
      %v547 = vsub.f32 %v483, %v523
      %v548 = vsub.f32 %v484, %v523
      %v549 = vadd.f32 %v544, 1e-06
      %v550 = vrsqrt.pop %v549
      %v551 = vmul.f32 %v545, %v550
      %v552 = vmul.f32 %v546, %v550
      %v553 = vmul.f32 %v547, %v550
      %v554 = vmul.f32 %v548, %v550
      %556 = vset.pattern.permute.xlu0 0
      %557 = vperm.xlu0 %556, %v485
      %v558 = vpop.permute.xlu0 %557
      %561 = vset.pattern.permute.xlu0 0
      %562 = vperm.xlu0 %561, %v486
      %v563 = vpop.permute.xlu0 %562
      %566 = vset.pattern.permute.xlu0 0
      %567 = vperm.xlu0 %566, %v487
      %v568 = vpop.permute.xlu0 %567
      %571 = vset.pattern.permute.xlu0 0
      %572 = vperm.xlu0 %571, %v488
      %v573 = vpop.permute.xlu0 %572
      %v575 = vmul.f32 %v551, %v558
      %v576 = vmul.f32 %v552, %v563
      %v577 = vmul.f32 %v553, %v568
      %v578 = vmul.f32 %v554, %v573
      %580 = vset.pattern.permute.xlu0 0
      %581 = vperm.xlu0 %580, %v489
      %v582 = vpop.permute.xlu0 %581
      %585 = vset.pattern.permute.xlu0 0
      %586 = vperm.xlu0 %585, %v490
      %v587 = vpop.permute.xlu0 %586
      %590 = vset.pattern.permute.xlu0 0
      %591 = vperm.xlu0 %590, %v491
      %v592 = vpop.permute.xlu0 %591
      %595 = vset.pattern.permute.xlu0 0
      %596 = vperm.xlu0 %595, %v492
      %v597 = vpop.permute.xlu0 %596
      %v599 = vadd.f32 %v575, %v582
      %v600 = vadd.f32 %v576, %v587
      %v601 = vadd.f32 %v577, %v592
      %v602 = vadd.f32 %v578, %v597
      %v603 = vxor.u32 %v599, 2147483648
      %v604 = vxor.u32 %v600, 2147483648
      %v605 = vxor.u32 %v601, 2147483648
      %v606 = vxor.u32 %v602, 2147483648
      %v607 = vmul.f32 %v603, 1.442695
      %v608 = vpow.pop %v607
      %v609 = vmul.f32 %v604, 1.442695
      %v610 = vpow.pop %v609
      %v611 = vmul.f32 %v605, 1.442695
      %v612 = vpow.pop %v611
      %v613 = vmul.f32 %v606, 1.442695
      %v614 = vpow.pop %v613
      %v615 = vadd.f32 %v608, 1.0
      %v616 = vadd.f32 %v610, 1.0
      %v617 = vadd.f32 %v612, 1.0
      %v618 = vadd.f32 %v614, 1.0
      %v619 = vrcp.pop %v615
      %v620 = vmul.f32 1.0, %v619
      %v621 = vrcp.pop %v616
      %v622 = vmul.f32 1.0, %v621
      %v623 = vrcp.pop %v617
      %v624 = vmul.f32 1.0, %v623
      %v625 = vrcp.pop %v618
      %v626 = vmul.f32 1.0, %v625
      %v627 = vmul.f32 %v599, %v620
      %v628 = vmul.f32 %v600, %v622
      %v629 = vmul.f32 %v601, %v624
      %v630 = vmul.f32 %v602, %v626
      %v631 = vpack.c.bf16 %v628, %v627
      %v632 = vpack.c.bf16 %v630, %v629
      %v633 = vld [vmem:[%s470] sm:$0xff]
      %v634 = vld [vmem:[%s470 + $0x8] sm:$0xff]
      %v635 = vld [vmem:[%s470 + $0x10] sm:$0xff]
      %v636 = vld [vmem:[%s470 + $0x18] sm:$0xff]
      %vm637 = vcmask 31744
      %v638 = vsel %vm637, %v633, 0.0
      %v639 = vsel %vm637, %v634, 0.0
      %v640 = vadd.f32 %v638, %v639
      %v641 = vsel %vm637, %v635, 0.0
      %v642 = vadd.f32 %v640, %v641
      %v643 = vsel %vm637, %v636, 0.0
      %v644 = vadd.f32 %v642, %v643
      %v645 = vrot.slane %v644, 4
      %v646 = vadd.f32 %v644, %v645
      %v647 = vrot.slane %v646, 2
      %v648 = vadd.f32 %v646, %v647
      %v649 = vrot.slane %v648, 1
      %v650 = vadd.f32 %v648, %v649
      %v651 = vmul.f32 %v650, 0.03125
      %v652 = vmul.f32 %v633, %v633
      %v653 = vmul.f32 %v634, %v634
      %v654 = vmul.f32 %v635, %v635
      %v655 = vmul.f32 %v636, %v636
      %v656 = vsel %vm637, %v652, 0.0
      %v657 = vsel %vm637, %v653, 0.0
      %v658 = vadd.f32 %v656, %v657
      %v659 = vsel %vm637, %v654, 0.0
      %v660 = vadd.f32 %v658, %v659
      %v661 = vsel %vm637, %v655, 0.0
      %v662 = vadd.f32 %v660, %v661
      %v663 = vrot.slane %v662, 4
      %v664 = vadd.f32 %v662, %v663
      %v665 = vrot.slane %v664, 2
      %v666 = vadd.f32 %v664, %v665
      %v667 = vrot.slane %v666, 1
      %v668 = vadd.f32 %v666, %v667
      %v669 = vmul.f32 %v668, 0.03125
      %v670 = vmul.f32 %v651, %v651
      %v671 = vsub.f32 %v669, %v670
      %v672 = vmax.f32 %v671, 0.0
      %v673 = vsub.f32 %v633, %v651
      %v674 = vsub.f32 %v634, %v651
      %v675 = vsub.f32 %v635, %v651
      %v676 = vsub.f32 %v636, %v651
      %v677 = vadd.f32 %v672, 1e-06
      %v678 = vrsqrt.pop %v677
      %v679 = vmul.f32 %v673, %v678
      %v680 = vmul.f32 %v674, %v678
      %v681 = vmul.f32 %v675, %v678
      %v682 = vmul.f32 %v676, %v678
      %v683 = vmul.f32 %v679, %v558
      %v684 = vmul.f32 %v680, %v563
      %v685 = vmul.f32 %v681, %v568
      %v686 = vmul.f32 %v682, %v573
      %v687 = vadd.f32 %v683, %v582
      %v688 = vadd.f32 %v684, %v587
      %v689 = vadd.f32 %v685, %v592
      %v690 = vadd.f32 %v686, %v597
      %v691 = vxor.u32 %v687, 2147483648
      %v692 = vxor.u32 %v688, 2147483648
      %v693 = vxor.u32 %v689, 2147483648
      %v694 = vxor.u32 %v690, 2147483648
      %v695 = vmul.f32 %v691, 1.442695
      %v696 = vpow.pop %v695
      %v697 = vmul.f32 %v692, 1.442695
      %v698 = vpow.pop %v697
      %v699 = vmul.f32 %v693, 1.442695
      %v700 = vpow.pop %v699
      %v701 = vmul.f32 %v694, 1.442695
      %v702 = vpow.pop %v701
      %v703 = vadd.f32 %v696, 1.0
      %v704 = vadd.f32 %v698, 1.0
      %v705 = vadd.f32 %v700, 1.0
      %v706 = vadd.f32 %v702, 1.0
      %v707 = vrcp.pop %v703
      %v708 = vmul.f32 1.0, %v707
      %v709 = vrcp.pop %v704
      %v710 = vmul.f32 1.0, %v709
      %v711 = vrcp.pop %v705
      %v712 = vmul.f32 1.0, %v711
      %v713 = vrcp.pop %v706
      %v714 = vmul.f32 1.0, %v713
      %v715 = vmul.f32 %v687, %v708
      %v716 = vmul.f32 %v688, %v710
      %v717 = vmul.f32 %v689, %v712
      %v718 = vmul.f32 %v690, %v714
      %p719 = scmp.gt.s32.totalorder %s480, 0
      %s720 = scalar_select %p719, 1, 0
      %s721 = scvt.s32.f32 %s720
      %s722 = sadd.s32 %s480, 16
      %v723 = vlaneseq
      %v724 = vand.u32 %v723, 127
      %v725 = vstv %s722
      %v726 = vadd.s32 %v725, %v724
      %vm727 = vcmp.lt.s32.totalorder %v726, 16
      %v728 = vsel %vm727, 1, 0
      %v729 = vcvt.s32.f32 %v728
      %v730 = vstv %s721
      %v731 = vmul.f32 %v715, %v730
      %v732 = vmul.f32 %v716, %v730
      %v733 = vmul.f32 %v717, %v730
      %v734 = vmul.f32 %v718, %v730
      %v735 = vpack.c.bf16 %v732, %v731
      %v736 = vpack.c.bf16 %v734, %v733
      %738 = vrot.lane.b32.xlu0 %v729, 2
      %v739 = vpop.permute.xlu0 %738
      %v741 = vmul.f32 %v715, %v739
      %v742 = vmul.f32 %v716, %v739
      %v743 = vmul.f32 %v717, %v739
      %v744 = vmul.f32 %v718, %v739
      %v745 = vpack.c.bf16 %v742, %v741
      %v746 = vpack.c.bf16 %v744, %v743
      %749 = vrot.lane.b32.xlu0 %v631, 2
      %v750 = vpop.permute.xlu0 %749
      %751 = vrot.lane.b32.xlu0 %v632, 2
      %v752 = vpop.permute.xlu0 %751
      %vm753 = vcmask 15360
      %v756 = vsel %vm753, %v735, %v750
      %v760 = vsel %vm753, %v736, %v752
      %764 = vrot.lane.b32.xlu0 %v735, 127
      %v765 = vpop.permute.xlu0 %764
      %766 = vrot.lane.b32.xlu0 %v736, 127
      %v767 = vpop.permute.xlu0 %766
      %768 = vrot.lane.b32.xlu0 %v631, 1
      %v769 = vpop.permute.xlu0 %768
      %770 = vrot.lane.b32.xlu0 %v632, 1
      %v771 = vpop.permute.xlu0 %770
      %774 = vrot.lane.b32.xlu0 %v745, 15
      %v775 = vpop.permute.xlu0 %774
      %776 = vrot.lane.b32.xlu0 %v746, 15
      %v777 = vpop.permute.xlu0 %776
      %vm778 = vcmask 7168
      %v781 = vsel %vm778, %v765, %v769
      %v784 = vsel %vm778, %v767, %v771
      %vm785 = vcmask 138240
      %v787 = vsel %vm785, %v781, %v775
      %v790 = vsel %vm785, %v784, %v777
      %792 = vrot.lane.b32.xlu0 %v745, 14
      %v793 = vpop.permute.xlu0 %792
      %794 = vrot.lane.b32.xlu0 %v746, 14
      %v795 = vpop.permute.xlu0 %794
      %v798 = vsel %vm509, %v631, %v793
      %v802 = vsel %vm509, %v632, %v795
      %v804 = vld [vmem:[%s4] sm:$0xf]
      %v805 = vld [vmem:[%s4 + $0x4] sm:$0xf]
      %v806 = vld [vmem:[%s4 + $0x8] sm:$0xf]
      %v807 = vld [vmem:[%s4 + $0xc] sm:$0xf]
      %v808 = vld [vmem:[%s4 + $0x10] sm:$0xf]
      %v809 = vld [vmem:[%s4 + $0x14] sm:$0xf]
      %v810 = vld [vmem:[%s4 + $0x18] sm:$0xf]
      %v811 = vld [vmem:[%s4 + $0x1c] sm:$0xf]
      %v812 = vld [vmem:[%s5] sm:$0xff]
      %v813 = vld [vmem:[%s5 + $0x8] sm:$0xff]
      %v814 = vld [vmem:[%s5 + $0x10] sm:$0xff]
      %v815 = vld [vmem:[%s5 + $0x18] sm:$0xff]
      %v816 = vld [vmem:[%s5 + $0x20] sm:$0xff]
      %v817 = vld [vmem:[%s5 + $0x28] sm:$0xff]
      %v818 = vld [vmem:[%s5 + $0x30] sm:$0xff]
      %v819 = vld [vmem:[%s5 + $0x38] sm:$0xff]
      %821 = vset.pattern.permute.xlu0 0
      %822 = vperm.xlu0 %821, %v812
      %v823 = vpop.permute.xlu0 %822
      %826 = vset.pattern.permute.xlu0 0
      %827 = vperm.xlu0 %826, %v813
      %v828 = vpop.permute.xlu0 %827
      %831 = vset.pattern.permute.xlu0 0
      %832 = vperm.xlu0 %831, %v814
      %v833 = vpop.permute.xlu0 %832
      %836 = vset.pattern.permute.xlu0 0
      %837 = vperm.xlu0 %836, %v815
      %v838 = vpop.permute.xlu0 %837
      %841 = vset.pattern.permute.xlu0 0
      %842 = vperm.xlu0 %841, %v816
      %v843 = vpop.permute.xlu0 %842
      %846 = vset.pattern.permute.xlu0 0
      %847 = vperm.xlu0 %846, %v817
      %v848 = vpop.permute.xlu0 %847
      %851 = vset.pattern.permute.xlu0 0
      %852 = vperm.xlu0 %851, %v818
      %v853 = vpop.permute.xlu0 %852
      %856 = vset.pattern.permute.xlu0 0
      %857 = vperm.xlu0 %856, %v819
      %v858 = vpop.permute.xlu0 %857
      %v868 = vunpack.c.l.b16 %v804
      %v869 = vunpack.c.l.b16 %v805
      %v870 = vunpack.c.l.b16 %v806
      %v871 = vunpack.c.l.b16 %v807
      %v872 = vunpack.c.l.b16 %v808
      %v873 = vunpack.c.l.b16 %v809
      %v874 = vunpack.c.l.b16 %v810
      %v875 = vunpack.c.l.b16 %v811
      %v876 = vpack.c.b16 %v869, %v868
      %v877 = vpack.c.b16 %v871, %v870
      %v878 = vpack.c.b16 %v873, %v872
      %v879 = vpack.c.b16 %v875, %v874
      %vm880 = vcmask 785408
      %v882 = vsel %vm880, %v876, 0
      %v885 = vsel %vm880, %v877, 0
      %v888 = vsel %vm880, %v878, 0
      %v891 = vsel %vm880, %v879, 0
      %893 = vmatprep.subr.bf16.mxu0 0
      %894 = vmatpush1.bf16.msra.mxu0 %v756
      %895 = vmatprep.subr.bf16.mxu0 0
      %896 = vmatpush1.bf16.msra.mxu0 %v760
      %897 = vmatprep.subr.bf16.mxu0 0
      %898 = vmatpush1.bf16.msra.mxu0 %v787
      %899 = vmatprep.subr.bf16.mxu0 0
      %900 = vmatpush1.bf16.msra.mxu0 %v790
      %901 = vmatprep.subr.bf16.mxu0 0
      %902 = vmatpush1.bf16.msra.mxu0 %v798
      %903 = vmatprep.subr.bf16.mxu0 0
      %904 = vmatpush1.bf16.msra.mxu0 %v802
      %905 = vmatprep.subr.bf16.mxu0 0
      %906 = vmatpush1.bf16.msra.mxu0 0
      %907 = vmatprep.subr.bf16.mxu0 0
      %908 = vmatpush1.bf16.msra.mxu0 0
      %909 = vmatprep.subr.bf16.mxu0 0
      %910 = vmatpush1.bf16.msra.mxu0 0
      %911 = vmatprep.subr.bf16.mxu0 0
      %912 = vmatpush1.bf16.msra.mxu0 0
      %913 = vmatprep.subr.bf16.mxu0 0
      %914 = vmatpush1.bf16.msra.mxu0 0
      %915 = vmatprep.subr.bf16.mxu0 0
      %916 = vmatpush1.bf16.msra.mxu0 0
      %917 = vmatprep.subr.bf16.mxu0 0
      %918 = vmatpush1.bf16.msra.mxu0 0
      %919 = vmatprep.subr.bf16.mxu0 0
      %920 = vmatpush1.bf16.msra.mxu0 0
      %921 = vmatprep.subr.bf16.mxu0 0
      %922 = vmatpush1.bf16.msra.mxu0 0
      %923 = vmatprep.subr.bf16.mxu0 0
      %924 = vmatpush1.bf16.msra.mxu0 0
      %925 = vmatprep.mubr.bf16.mxu0 0
      %926 = vmatmul.mubr.bf16.gmra.mrb[0].mxu0 %v882
      %v927 = vpop.f32.mrb[0].mxu0
      %v928 = vadd.f32 %v823, %v927
      %v929 = vpop.f32.mrb[0].mxu0
      %v930 = vpop.f32.mrb[0].mxu0
      %v931 = vadd.f32 %v828, %v930
      %v932 = vpop.f32.mrb[0].mxu0
      %933 = vmatprep.mubr.bf16.mxu0 0
      %934 = vmatmul.mubr.bf16.gmra.mrb[0].mxu0 %v885
      %v935 = vpop.f32.mrb[0].mxu0
      %v936 = vadd.f32 %v833, %v935
      %v937 = vpop.f32.mrb[0].mxu0
      %v938 = vpop.f32.mrb[0].mxu0
      %v939 = vadd.f32 %v838, %v938
      %v940 = vpop.f32.mrb[0].mxu0
      %941 = vmatprep.mubr.bf16.mxu0 0
      %942 = vmatmul.mubr.bf16.gmra.mrb[0].mxu0 %v888
      %v943 = vpop.f32.mrb[0].mxu0
      %v944 = vadd.f32 %v843, %v943
      %v945 = vpop.f32.mrb[0].mxu0
      %v946 = vpop.f32.mrb[0].mxu0
      %v947 = vadd.f32 %v848, %v946
      %v948 = vpop.f32.mrb[0].mxu0
      %949 = vmatprep.mubr.bf16.mxu0 0
      %950 = vmatmul.mubr.bf16.gmra.mrb[0].mxu0 %v891
      %v951 = vpop.f32.mrb[0].mxu0
      %v952 = vadd.f32 %v853, %v951
      %v953 = vpop.f32.mrb[0].mxu0
      %v954 = vpop.f32.mrb[0].mxu0
      %v955 = vadd.f32 %v858, %v954
      %v956 = vpop.f32.mrb[0].mxu0
      %957 = vdwg.mxu0
      %vm958 = vcmask 146432
      %v959 = vsel %vm958, %v928, 0.0
      %v960 = vsel %vm958, %v931, 0.0
      %v961 = vadd.f32 %v959, %v960
      %v962 = vsel %vm958, %v936, 0.0
      %v963 = vadd.f32 %v961, %v962
      %v964 = vsel %vm958, %v939, 0.0
      %v965 = vadd.f32 %v963, %v964
      %v966 = vsel %vm958, %v944, 0.0
      %v967 = vadd.f32 %v965, %v966
      %v968 = vsel %vm958, %v947, 0.0
      %v969 = vadd.f32 %v967, %v968
      %v970 = vsel %vm958, %v952, 0.0
      %v971 = vadd.f32 %v969, %v970
      %v972 = vsel %vm958, %v955, 0.0
      %v973 = vadd.f32 %v971, %v972
      %v974 = vrot.slane %v973, 4
      %v975 = vadd.f32 %v973, %v974
      %v976 = vrot.slane %v975, 2
      %v977 = vadd.f32 %v975, %v976
      %v978 = vrot.slane %v977, 1
      %v979 = vadd.f32 %v977, %v978
      %v980 = vmul.f32 %v979, 0.015625
      %v981 = vmul.f32 %v928, %v928
      %v982 = vmul.f32 %v931, %v931
      %v983 = vmul.f32 %v936, %v936
      %v984 = vmul.f32 %v939, %v939
      %v985 = vmul.f32 %v944, %v944
      %v986 = vmul.f32 %v947, %v947
      %v987 = vmul.f32 %v952, %v952
      %v988 = vmul.f32 %v955, %v955
      %v989 = vsel %vm958, %v981, 0.0
      %v990 = vsel %vm958, %v982, 0.0
      %v991 = vadd.f32 %v989, %v990
      %v992 = vsel %vm958, %v983, 0.0
      %v993 = vadd.f32 %v991, %v992
      %v994 = vsel %vm958, %v984, 0.0
      %v995 = vadd.f32 %v993, %v994
      %v996 = vsel %vm958, %v985, 0.0
      %v997 = vadd.f32 %v995, %v996
      %v998 = vsel %vm958, %v986, 0.0
      %v999 = vadd.f32 %v997, %v998
      %v1000 = vsel %vm958, %v987, 0.0
      %v1001 = vadd.f32 %v999, %v1000
      %v1002 = vsel %vm958, %v988, 0.0
      %v1003 = vadd.f32 %v1001, %v1002
      %v1004 = vrot.slane %v1003, 4
      %v1005 = vadd.f32 %v1003, %v1004
      %v1006 = vrot.slane %v1005, 2
      %v1007 = vadd.f32 %v1005, %v1006
      %v1008 = vrot.slane %v1007, 1
      %v1009 = vadd.f32 %v1007, %v1008
      %v1010 = vmul.f32 %v1009, 0.015625
      %v1011 = vmul.f32 %v980, %v980
      %v1012 = vsub.f32 %v1010, %v1011
      %v1013 = vmax.f32 %v1012, 0.0
      %v1014 = vsub.f32 %v928, %v980
      %v1015 = vsub.f32 %v931, %v980
      %v1016 = vsub.f32 %v936, %v980
      %v1017 = vsub.f32 %v939, %v980
      %v1018 = vsub.f32 %v944, %v980
      %v1019 = vsub.f32 %v947, %v980
      %v1020 = vsub.f32 %v952, %v980
      %v1021 = vsub.f32 %v955, %v980
      %v1022 = vadd.f32 %v1013, 1e-06
      %v1023 = vrsqrt.pop %v1022
      %v1024 = vmul.f32 %v1014, %v1023
      %v1025 = vmul.f32 %v1015, %v1023
      %v1026 = vmul.f32 %v1016, %v1023
      %v1027 = vmul.f32 %v1017, %v1023
      %v1028 = vmul.f32 %v1018, %v1023
      %v1029 = vmul.f32 %v1019, %v1023
      %v1030 = vmul.f32 %v1020, %v1023
      %v1031 = vmul.f32 %v1021, %v1023
      %1033 = vset.pattern.permute.xlu0 0
      %1034 = vperm.xlu0 %1033, %v493
      %v1035 = vpop.permute.xlu0 %1034
      %1038 = vset.pattern.permute.xlu0 0
      %1039 = vperm.xlu0 %1038, %v494
      %v1040 = vpop.permute.xlu0 %1039
      %1043 = vset.pattern.permute.xlu0 0
      %1044 = vperm.xlu0 %1043, %v495
      %v1045 = vpop.permute.xlu0 %1044
      %1048 = vset.pattern.permute.xlu0 0
      %1049 = vperm.xlu0 %1048, %v496
      %v1050 = vpop.permute.xlu0 %1049
      %1053 = vset.pattern.permute.xlu0 0
      %1054 = vperm.xlu0 %1053, %v497
      %v1055 = vpop.permute.xlu0 %1054
      %1058 = vset.pattern.permute.xlu0 0
      %1059 = vperm.xlu0 %1058, %v498
      %v1060 = vpop.permute.xlu0 %1059
      %1063 = vset.pattern.permute.xlu0 0
      %1064 = vperm.xlu0 %1063, %v499
      %v1065 = vpop.permute.xlu0 %1064
      %1068 = vset.pattern.permute.xlu0 0
      %1069 = vperm.xlu0 %1068, %v500
      %v1070 = vpop.permute.xlu0 %1069
      %v1072 = vmul.f32 %v1024, %v1035
      %v1073 = vmul.f32 %v1025, %v1040
      %v1074 = vmul.f32 %v1026, %v1045
      %v1075 = vmul.f32 %v1027, %v1050
      %v1076 = vmul.f32 %v1028, %v1055
      %v1077 = vmul.f32 %v1029, %v1060
      %v1078 = vmul.f32 %v1030, %v1065
      %v1079 = vmul.f32 %v1031, %v1070
      %1081 = vset.pattern.permute.xlu0 0
      %1082 = vperm.xlu0 %1081, %v501
      %v1083 = vpop.permute.xlu0 %1082
      %1086 = vset.pattern.permute.xlu0 0
      %1087 = vperm.xlu0 %1086, %v502
      %v1088 = vpop.permute.xlu0 %1087
      %1091 = vset.pattern.permute.xlu0 0
      %1092 = vperm.xlu0 %1091, %v503
      %v1093 = vpop.permute.xlu0 %1092
      %1096 = vset.pattern.permute.xlu0 0
      %1097 = vperm.xlu0 %1096, %v504
      %v1098 = vpop.permute.xlu0 %1097
      %1101 = vset.pattern.permute.xlu0 0
      %1102 = vperm.xlu0 %1101, %v505
      %v1103 = vpop.permute.xlu0 %1102
      %1106 = vset.pattern.permute.xlu0 0
      %1107 = vperm.xlu0 %1106, %v506
      %v1108 = vpop.permute.xlu0 %1107
      %1111 = vset.pattern.permute.xlu0 0
      %1112 = vperm.xlu0 %1111, %v507
      %v1113 = vpop.permute.xlu0 %1112
      %1116 = vset.pattern.permute.xlu0 0
      %1117 = vperm.xlu0 %1116, %v508
      %v1118 = vpop.permute.xlu0 %1117
      %v1120 = vadd.f32 %v1072, %v1083
      %v1121 = vadd.f32 %v1073, %v1088
      %v1122 = vadd.f32 %v1074, %v1093
      %v1123 = vadd.f32 %v1075, %v1098
      %v1124 = vadd.f32 %v1076, %v1103
      %v1125 = vadd.f32 %v1077, %v1108
      %v1126 = vadd.f32 %v1078, %v1113
      %v1127 = vadd.f32 %v1079, %v1118
      %v1128 = vxor.u32 %v1120, 2147483648
      %v1129 = vxor.u32 %v1121, 2147483648
      %v1130 = vxor.u32 %v1122, 2147483648
      %v1131 = vxor.u32 %v1123, 2147483648
      %v1132 = vxor.u32 %v1124, 2147483648
      %v1133 = vxor.u32 %v1125, 2147483648
      %v1134 = vxor.u32 %v1126, 2147483648
      %v1135 = vxor.u32 %v1127, 2147483648
      %v1136 = vmul.f32 %v1128, 1.442695
      %v1137 = vpow.pop %v1136
      %v1138 = vmul.f32 %v1129, 1.442695
      %v1139 = vpow.pop %v1138
      %v1140 = vmul.f32 %v1130, 1.442695
      %v1141 = vpow.pop %v1140
      %v1142 = vmul.f32 %v1131, 1.442695
      %v1143 = vpow.pop %v1142
      %v1144 = vmul.f32 %v1132, 1.442695
      %v1145 = vpow.pop %v1144
      %v1146 = vmul.f32 %v1133, 1.442695
      %v1147 = vpow.pop %v1146
      %v1148 = vmul.f32 %v1134, 1.442695
      %v1149 = vpow.pop %v1148
      %v1150 = vmul.f32 %v1135, 1.442695
      %v1151 = vpow.pop %v1150
      %v1152 = vadd.f32 %v1137, 1.0
      %v1153 = vadd.f32 %v1139, 1.0
      %v1154 = vadd.f32 %v1141, 1.0
      %v1155 = vadd.f32 %v1143, 1.0
      %v1156 = vadd.f32 %v1145, 1.0
      %v1157 = vadd.f32 %v1147, 1.0
      %v1158 = vadd.f32 %v1149, 1.0
      %v1159 = vadd.f32 %v1151, 1.0
      %v1160 = vrcp.pop %v1152
      %v1161 = vmul.f32 1.0, %v1160
      %v1162 = vrcp.pop %v1153
      %v1163 = vmul.f32 1.0, %v1162
      %v1164 = vrcp.pop %v1154
      %v1165 = vmul.f32 1.0, %v1164
      %v1166 = vrcp.pop %v1155
      %v1167 = vmul.f32 1.0, %v1166
      %v1168 = vrcp.pop %v1156
      %v1169 = vmul.f32 1.0, %v1168
      %v1170 = vrcp.pop %v1157
      %v1171 = vmul.f32 1.0, %v1170
      %v1172 = vrcp.pop %v1158
      %v1173 = vmul.f32 1.0, %v1172
      %v1174 = vrcp.pop %v1159
      %v1175 = vmul.f32 1.0, %v1174
      %v1176 = vmul.f32 %v1120, %v1161
      %v1177 = vmul.f32 %v1121, %v1163
      %v1178 = vmul.f32 %v1122, %v1165
      %v1179 = vmul.f32 %v1123, %v1167
      %v1180 = vmul.f32 %v1124, %v1169
      %v1181 = vmul.f32 %v1125, %v1171
      %v1182 = vmul.f32 %v1126, %v1173
      %v1183 = vmul.f32 %v1127, %v1175
      %s1184 = ssub.s32 %s480, 1
      %v1185 = vstv %s1184
      %v1186 = vadd.s32 %v1185, %v724
      %vm1187 = vcmp.ge.s32.totalorder %v1186, 0
      %vm1188 = vcmp.lt.s32.totalorder %v1186, 16
      %vm1189 = vmand %vm1187, %vm1188
      %v1190 = vsel %vm1189, 1, 0
      %vm1191 = vcmp.eq.s32.totalorder %v1190, 1
      %v1192 = vsel %vm1191, %v1176, 0.0
      %v1193 = vsel %vm1191, %v1177, 0.0
      %v1194 = vsel %vm1191, %v1178, 0.0
      %v1195 = vsel %vm1191, %v1179, 0.0
      %v1196 = vsel %vm1191, %v1180, 0.0
      %v1197 = vsel %vm1191, %v1181, 0.0
      %v1198 = vsel %vm1191, %v1182, 0.0
      %v1199 = vsel %vm1191, %v1183, 0.0
      %v1200 = vpack.c.bf16 %v1193, %v1192
      %v1201 = vpack.c.bf16 %v1195, %v1194
      %v1202 = vpack.c.bf16 %v1197, %v1196
      %v1203 = vpack.c.bf16 %v1199, %v1198
      %1208 = vrot.lane.b32.xlu0 %v1200, 127
      %v1209 = vpop.permute.xlu0 %1208
      %1210 = vrot.lane.b32.xlu0 %v1201, 127
      %v1211 = vpop.permute.xlu0 %1210
      %1212 = vrot.lane.b32.xlu0 %v1202, 127
      %v1213 = vpop.permute.xlu0 %1212
      %1214 = vrot.lane.b32.xlu0 %v1203, 127
      %v1215 = vpop.permute.xlu0 %1214
      %1220 = vrot.lane.b32.xlu0 %v1200, 126
      %v1221 = vpop.permute.xlu0 %1220
      %1222 = vrot.lane.b32.xlu0 %v1201, 126
      %v1223 = vpop.permute.xlu0 %1222
      %1224 = vrot.lane.b32.xlu0 %v1202, 126
      %v1225 = vpop.permute.xlu0 %1224
      %1226 = vrot.lane.b32.xlu0 %v1203, 126
      %v1227 = vpop.permute.xlu0 %1226
      %v1232 = vld [vmem:[%s8] sm:$0xff]
      %v1233 = vld [vmem:[%s8 + $0x8] sm:$0xff]
      %v1234 = vld [vmem:[%s8 + $0x10] sm:$0xff]
      %v1235 = vld [vmem:[%s8 + $0x18] sm:$0xff]
      %v1236 = vld [vmem:[%s8 + $0x20] sm:$0xff]
      %v1237 = vld [vmem:[%s8 + $0x28] sm:$0xff]
      %v1238 = vld [vmem:[%s8 + $0x30] sm:$0xff]
      %v1239 = vld [vmem:[%s8 + $0x38] sm:$0xff]
      %v1240 = vld [vmem:[%s9] sm:$0xff]
      %v1241 = vld [vmem:[%s9 + $0x8] sm:$0xff]
      %v1242 = vld [vmem:[%s9 + $0x10] sm:$0xff]
      %v1243 = vld [vmem:[%s9 + $0x18] sm:$0xff]
      %v1244 = vld [vmem:[%s9 + $0x20] sm:$0xff]
      %v1245 = vld [vmem:[%s9 + $0x28] sm:$0xff]
      %v1246 = vld [vmem:[%s9 + $0x30] sm:$0xff]
      %v1247 = vld [vmem:[%s9 + $0x38] sm:$0xff]
      %1249 = vset.pattern.permute.xlu0 0
      %1250 = vperm.xlu0 %1249, %v1240
      %v1251 = vpop.permute.xlu0 %1250
      %1254 = vset.pattern.permute.xlu0 0
      %1255 = vperm.xlu0 %1254, %v1241
      %v1256 = vpop.permute.xlu0 %1255
      %1259 = vset.pattern.permute.xlu0 0
      %1260 = vperm.xlu0 %1259, %v1242
      %v1261 = vpop.permute.xlu0 %1260
      %1264 = vset.pattern.permute.xlu0 0
      %1265 = vperm.xlu0 %1264, %v1243
      %v1266 = vpop.permute.xlu0 %1265
      %1269 = vset.pattern.permute.xlu0 0
      %1270 = vperm.xlu0 %1269, %v1244
      %v1271 = vpop.permute.xlu0 %1270
      %1274 = vset.pattern.permute.xlu0 0
      %1275 = vperm.xlu0 %1274, %v1245
      %v1276 = vpop.permute.xlu0 %1275
      %1279 = vset.pattern.permute.xlu0 0
      %1280 = vperm.xlu0 %1279, %v1246
      %v1281 = vpop.permute.xlu0 %1280
      %1284 = vset.pattern.permute.xlu0 0
      %1285 = vperm.xlu0 %1284, %v1247
      %v1286 = vpop.permute.xlu0 %1285
      %v1296 = vunpack.c.l.b16 %v1232
      %v1297 = vunpack.c.h.b16 %v1232
      %v1298 = vunpack.c.l.b16 %v1233
      %v1299 = vunpack.c.h.b16 %v1233
      %v1300 = vunpack.c.l.b16 %v1234
      %v1301 = vunpack.c.h.b16 %v1234
      %v1302 = vunpack.c.l.b16 %v1235
      %v1303 = vunpack.c.h.b16 %v1235
      %v1304 = vunpack.c.l.b16 %v1236
      %v1305 = vunpack.c.h.b16 %v1236
      %v1306 = vunpack.c.l.b16 %v1237
      %v1307 = vunpack.c.h.b16 %v1237
      %v1308 = vunpack.c.l.b16 %v1238
      %v1309 = vunpack.c.h.b16 %v1238
      %v1310 = vunpack.c.l.b16 %v1239
      %v1311 = vunpack.c.h.b16 %v1239
      %v1312 = vpack.c.b16 %v1298, %v1296
      %v1313 = vpack.c.b16 %v1299, %v1297
      %v1314 = vpack.c.b16 %v1302, %v1300
      %v1315 = vpack.c.b16 %v1303, %v1301
      %v1316 = vpack.c.b16 %v1306, %v1304
      %v1317 = vpack.c.b16 %v1307, %v1305
      %v1318 = vpack.c.b16 %v1310, %v1308
      %v1319 = vpack.c.b16 %v1311, %v1309
      %vm1324 = vcmask 523264
      %v1326 = vsel %vm1324, %v1313, 0
      %v1329 = vsel %vm1324, %v1315, 0
      %v1332 = vsel %vm1324, %v1317, 0
      %v1335 = vsel %vm1324, %v1319, 0
      %1337 = vmatprep.subr.bf16.mxu0 0
      %1338 = vmatpush1.bf16.msra.mxu0 %v1200
      %1339 = vmatprep.subr.bf16.mxu0 0
      %1340 = vmatpush1.bf16.msra.mxu0 %v1201
      %1341 = vmatprep.subr.bf16.mxu0 0
      %1342 = vmatpush1.bf16.msra.mxu0 %v1202
      %1343 = vmatprep.subr.bf16.mxu0 0
      %1344 = vmatpush1.bf16.msra.mxu0 %v1203
      %1345 = vmatprep.subr.bf16.mxu0 0
      %1346 = vmatpush1.bf16.msra.mxu0 %v1209
      %1347 = vmatprep.subr.bf16.mxu0 0
      %1348 = vmatpush1.bf16.msra.mxu0 %v1211
      %1349 = vmatprep.subr.bf16.mxu0 0
      %1350 = vmatpush1.bf16.msra.mxu0 %v1213
      %1351 = vmatprep.subr.bf16.mxu0 0
      %1352 = vmatpush1.bf16.msra.mxu0 %v1215
      %1353 = vmatprep.subr.bf16.mxu0 0
      %1354 = vmatpush1.bf16.msra.mxu0 %v1221
      %1355 = vmatprep.subr.bf16.mxu0 0
      %1356 = vmatpush1.bf16.msra.mxu0 %v1223
      %1357 = vmatprep.subr.bf16.mxu0 0
      %1358 = vmatpush1.bf16.msra.mxu0 %v1225
      %1359 = vmatprep.subr.bf16.mxu0 0
      %1360 = vmatpush1.bf16.msra.mxu0 %v1227
      %1361 = vmatprep.subr.bf16.mxu0 0
      %1362 = vmatpush1.bf16.msra.mxu0 0
      %1363 = vmatprep.subr.bf16.mxu0 0
      %1364 = vmatpush1.bf16.msra.mxu0 0
      %1365 = vmatprep.subr.bf16.mxu0 0
      %1366 = vmatpush1.bf16.msra.mxu0 0
      %1367 = vmatprep.subr.bf16.mxu0 0
      %1368 = vmatpush1.bf16.msra.mxu0 0
      %1369 = vmatprep.mubr.bf16.mxu0 %v1326
      %1370 = vmatmul.mubr.bf16.gmra.mrb[0].mxu0 %v1312
      %v1371 = vpop.f32.mrb[0].mxu0
      %v1372 = vadd.f32 %v1251, %v1371
      %v1373 = vpop.f32.mrb[0].mxu0
      %v1374 = vpop.f32.mrb[0].mxu0
      %v1375 = vadd.f32 %v1256, %v1374
      %v1376 = vpop.f32.mrb[0].mxu0
      %1377 = vmatprep.mubr.bf16.mxu0 %v1329
      %1378 = vmatmul.mubr.bf16.gmra.mrb[0].mxu0 %v1314
      %v1379 = vpop.f32.mrb[0].mxu0
      %v1380 = vadd.f32 %v1261, %v1379
      %v1381 = vpop.f32.mrb[0].mxu0
      %v1382 = vpop.f32.mrb[0].mxu0
      %v1383 = vadd.f32 %v1266, %v1382
      %v1384 = vpop.f32.mrb[0].mxu0
      %1385 = vmatprep.mubr.bf16.mxu0 %v1332
      %1386 = vmatmul.mubr.bf16.gmra.mrb[0].mxu0 %v1316
      %v1387 = vpop.f32.mrb[0].mxu0
      %v1388 = vadd.f32 %v1271, %v1387
      %v1389 = vpop.f32.mrb[0].mxu0
      %v1390 = vpop.f32.mrb[0].mxu0
      %v1391 = vadd.f32 %v1276, %v1390
      %v1392 = vpop.f32.mrb[0].mxu0
      %1393 = vmatprep.mubr.bf16.mxu0 %v1335
      %1394 = vmatmul.mubr.bf16.gmra.mrb[0].mxu0 %v1318
      %v1395 = vpop.f32.mrb[0].mxu0
      %v1396 = vadd.f32 %v1281, %v1395
      %v1397 = vpop.f32.mrb[0].mxu0
      %v1398 = vpop.f32.mrb[0].mxu0
      %v1399 = vadd.f32 %v1286, %v1398
      %v1400 = vpop.f32.mrb[0].mxu0
      %1401 = vdwg.mxu0
      %v1402 = vld [vmem:[%s10] sm:$0xf]
      %v1403 = vld [vmem:[%s10 + $0x4] sm:$0xf]
      %v1404 = vld [vmem:[%s10 + $0x8] sm:$0xf]
      %v1405 = vld [vmem:[%s10 + $0xc] sm:$0xf]
      %v1406 = vld [vmem:[%s10 + $0x10] sm:$0xf]
      %v1407 = vld [vmem:[%s10 + $0x14] sm:$0xf]
      %v1408 = vld [vmem:[%s10 + $0x18] sm:$0xf]
      %v1409 = vld [vmem:[%s10 + $0x1c] sm:$0xf]
      %v1410 = vpack.c.bf16 %v482, %v481
      %v1411 = vpack.c.bf16 %v484, %v483
      %v1412 = vld [vmem:[%s11] sm:$0xff]
      %v1413 = vld [vmem:[%s11 + $0x8] sm:$0xff]
      %v1414 = vld [vmem:[%s11 + $0x10] sm:$0xff]
      %v1415 = vld [vmem:[%s11 + $0x18] sm:$0xff]
      %v1416 = vld [vmem:[%s11 + $0x20] sm:$0xff]
      %v1417 = vld [vmem:[%s11 + $0x28] sm:$0xff]
      %v1418 = vld [vmem:[%s11 + $0x30] sm:$0xff]
      %v1419 = vld [vmem:[%s11 + $0x38] sm:$0xff]
      %1421 = vset.pattern.permute.xlu0 0
      %1422 = vperm.xlu0 %1421, %v1412
      %v1423 = vpop.permute.xlu0 %1422
      %1426 = vset.pattern.permute.xlu0 0
      %1427 = vperm.xlu0 %1426, %v1413
      %v1428 = vpop.permute.xlu0 %1427
      %1431 = vset.pattern.permute.xlu0 0
      %1432 = vperm.xlu0 %1431, %v1414
      %v1433 = vpop.permute.xlu0 %1432
      %1436 = vset.pattern.permute.xlu0 0
      %1437 = vperm.xlu0 %1436, %v1415
      %v1438 = vpop.permute.xlu0 %1437
      %1441 = vset.pattern.permute.xlu0 0
      %1442 = vperm.xlu0 %1441, %v1416
      %v1443 = vpop.permute.xlu0 %1442
      %1446 = vset.pattern.permute.xlu0 0
      %1447 = vperm.xlu0 %1446, %v1417
      %v1448 = vpop.permute.xlu0 %1447
      %1451 = vset.pattern.permute.xlu0 0
      %1452 = vperm.xlu0 %1451, %v1418
      %v1453 = vpop.permute.xlu0 %1452
      %1456 = vset.pattern.permute.xlu0 0
      %1457 = vperm.xlu0 %1456, %v1419
      %v1458 = vpop.permute.xlu0 %1457
      %v1468 = vunpack.c.l.b16 %v1402
      %v1469 = vunpack.c.l.b16 %v1403
      %v1470 = vunpack.c.l.b16 %v1404
      %v1471 = vunpack.c.l.b16 %v1405
      %v1472 = vunpack.c.l.b16 %v1406
      %v1473 = vunpack.c.l.b16 %v1407
      %v1474 = vunpack.c.l.b16 %v1408
      %v1475 = vunpack.c.l.b16 %v1409
      %v1476 = vpack.c.b16 %v1469, %v1468
      %v1477 = vpack.c.b16 %v1471, %v1470
      %v1478 = vpack.c.b16 %v1473, %v1472
      %v1479 = vpack.c.b16 %v1475, %v1474
      %vm1480 = vcmask 261120
      %v1482 = vsel %vm1480, %v1476, 0
      %v1485 = vsel %vm1480, %v1477, 0
      %v1488 = vsel %vm1480, %v1478, 0
      %v1491 = vsel %vm1480, %v1479, 0
      %1493 = vmatprep.subr.bf16.mxu0 0
      %1494 = vmatpush1.bf16.msra.mxu0 %v1410
      %1495 = vmatprep.subr.bf16.mxu0 0
      %1496 = vmatpush1.bf16.msra.mxu0 %v1411
      %1497 = vmatprep.subr.bf16.mxu0 0
      %1498 = vmatpush1.bf16.msra.mxu0 0
      %1499 = vmatprep.subr.bf16.mxu0 0
      %1500 = vmatpush1.bf16.msra.mxu0 0
      %1501 = vmatprep.subr.bf16.mxu0 0
      %1502 = vmatpush1.bf16.msra.mxu0 0
      %1503 = vmatprep.subr.bf16.mxu0 0
      %1504 = vmatpush1.bf16.msra.mxu0 0
      %1505 = vmatprep.subr.bf16.mxu0 0
      %1506 = vmatpush1.bf16.msra.mxu0 0
      %1507 = vmatprep.subr.bf16.mxu0 0
      %1508 = vmatpush1.bf16.msra.mxu0 0
      %1509 = vmatprep.subr.bf16.mxu0 0
      %1510 = vmatpush1.bf16.msra.mxu0 0
      %1511 = vmatprep.subr.bf16.mxu0 0
      %1512 = vmatpush1.bf16.msra.mxu0 0
      %1513 = vmatprep.subr.bf16.mxu0 0
      %1514 = vmatpush1.bf16.msra.mxu0 0
      %1515 = vmatprep.subr.bf16.mxu0 0
      %1516 = vmatpush1.bf16.msra.mxu0 0
      %1517 = vmatprep.subr.bf16.mxu0 0
      %1518 = vmatpush1.bf16.msra.mxu0 0
      %1519 = vmatprep.subr.bf16.mxu0 0
      %1520 = vmatpush1.bf16.msra.mxu0 0
      %1521 = vmatprep.subr.bf16.mxu0 0
      %1522 = vmatpush1.bf16.msra.mxu0 0
      %1523 = vmatprep.subr.bf16.mxu0 0
      %1524 = vmatpush1.bf16.msra.mxu0 0
      %1525 = vmatprep.mubr.bf16.mxu0 0
      %1526 = vmatmul.mubr.bf16.gmra.mrb[0].mxu0 %v1482
      %v1527 = vpop.f32.mrb[0].mxu0
      %v1528 = vadd.f32 %v1423, %v1527
      %v1529 = vpop.f32.mrb[0].mxu0
      %v1530 = vpop.f32.mrb[0].mxu0
      %v1531 = vadd.f32 %v1428, %v1530
      %v1532 = vpop.f32.mrb[0].mxu0
      %1533 = vmatprep.mubr.bf16.mxu0 0
      %1534 = vmatmul.mubr.bf16.gmra.mrb[0].mxu0 %v1485
      %v1535 = vpop.f32.mrb[0].mxu0
      %v1536 = vadd.f32 %v1433, %v1535
      %v1537 = vpop.f32.mrb[0].mxu0
      %v1538 = vpop.f32.mrb[0].mxu0
      %v1539 = vadd.f32 %v1438, %v1538
      %v1540 = vpop.f32.mrb[0].mxu0
      %1541 = vmatprep.mubr.bf16.mxu0 0
      %1542 = vmatmul.mubr.bf16.gmra.mrb[0].mxu0 %v1488
      %v1543 = vpop.f32.mrb[0].mxu0
      %v1544 = vadd.f32 %v1443, %v1543
      %v1545 = vpop.f32.mrb[0].mxu0
      %v1546 = vpop.f32.mrb[0].mxu0
      %v1547 = vadd.f32 %v1448, %v1546
      %v1548 = vpop.f32.mrb[0].mxu0
      %1549 = vmatprep.mubr.bf16.mxu0 0
      %1550 = vmatmul.mubr.bf16.gmra.mrb[0].mxu0 %v1491
      %v1551 = vpop.f32.mrb[0].mxu0
      %v1552 = vadd.f32 %v1453, %v1551
      %v1553 = vpop.f32.mrb[0].mxu0
      %v1554 = vpop.f32.mrb[0].mxu0
      %v1555 = vadd.f32 %v1458, %v1554
      %v1556 = vpop.f32.mrb[0].mxu0
      %1557 = vdwg.mxu0
      %v1558 = vadd.f32 %v1528, %v1372
      %v1559 = vadd.f32 %v1531, %v1375
      %v1560 = vadd.f32 %v1536, %v1380
      %v1561 = vadd.f32 %v1539, %v1383
      %v1562 = vadd.f32 %v1544, %v1388
      %v1563 = vadd.f32 %v1547, %v1391
      %v1564 = vadd.f32 %v1552, %v1396
      %v1565 = vadd.f32 %v1555, %v1399
      %1566 = vst.msk [vmem:[%s478] sm:$0xff] %vm509, %v1558
      %1567 = vst.msk [vmem:[%s478 + $0x8] sm:$0xff] %vm509, %v1559
      %1568 = vst.msk [vmem:[%s478 + $0x10] sm:$0xff] %vm509, %v1560
      %1569 = vst.msk [vmem:[%s478 + $0x18] sm:$0xff] %vm509, %v1561
      %1570 = vst.msk [vmem:[%s478 + $0x20] sm:$0xff] %vm509, %v1562
      %1571 = vst.msk [vmem:[%s478 + $0x28] sm:$0xff] %vm509, %v1563
      %1572 = vst.msk [vmem:[%s478 + $0x30] sm:$0xff] %vm509, %v1564
      %1573 = vst.msk [vmem:[%s478 + $0x38] sm:$0xff] %vm509, %v1565
      %p1574 = scmp.lt.s32.totalorder %s27, 1
      %s1575 = scalar_select %p1574, %s27, 1
      %p1576 = scmp.lt.s32.totalorder %s28, 0
      %s1577 = scalar_select %p1576, %s28, 0
      %s1578 = smul.addr %s1575, 8
      %s1579 = sadd.s32 %s1577, %s1578
      %s1580 = smul.addr %s1579, 8
      %s1581 = scalar_lea.vmem %s12, %s1580
      // Predicated region
      $region69: #{tpu_custom_call.1} parent=67 // pred_check
        %p1582 = pneg %p321
      $region70: #{tpu_custom_call.1} parent=67 // pred_check_branch
        %1584 = sbr.rel (%p1582) target = $region72
      $region71: #{tpu_custom_call.1} parent=67 // pred_region
        _
      $region72: #{tpu_custom_call.1} parent=67 // pred_fallthru
        _
    $region68: #{tpu_custom_call.1} parent=5 // pred_fallthru
      _
    %p1585 = scmp.le.s32.totalorder 2, %s18
    // Predicated region
    $region73: #{tpu_custom_call.1} parent=5 // pred_check
      %p1586 = pneg %p1585
    $region74: #{tpu_custom_call.1} parent=5 // pred_check_branch
      %1588 = sbr.rel (%p1586) target = $region76
    $region75: #{tpu_custom_call.1} parent=5 // pred_region
      %s1589 = ssub.s32 %s18, 2
      // Predicated region
      $region77: #{tpu_custom_call.1} parent=75 // pred_check
        %p1590 = pneg %p327
      $region78: #{tpu_custom_call.1} parent=75 // pred_check_branch
        %1592 = sbr.rel (%p1590) target = $region80
      $region79: #{tpu_custom_call.1} parent=75 // pred_region
        %p1593 = scmp.lt.s32.totalorder %s29, 1
        %s1594 = scalar_select %p1593, %s29, 1
        %p1595 = scmp.lt.s32.totalorder %s30, 0
        %s1596 = scalar_select %p1595, %s30, 0
        %s1597 = smul.addr %s1594, 8
        %s1598 = sadd.s32 %s1596, %s1597
        %s1599 = smul.addr %s1598, 8
        %s1600 = scalar_lea.vmem %s12, %s1599
      $region80: #{tpu_custom_call.1} parent=75 // pred_fallthru
        _
    $region76: #{tpu_custom_call.1} parent=5 // pred_fallthru
      _
  $region6: #{tpu_custom_call.1} parent=0 // loop_footer
    %s22 = sadd.s32 1, %s18
  $region7: #{tpu_custom_call.1} parent=0 // loop_footer_branch
    %17 = sbr.rel target = $region3
  $region8: #{tpu_custom_call.1} parent=0 // loop_exit
    _

</llo_original>
